<compile_context>
chip_gen: v6e
topology: v6e:2x2x1
jax: 0.10.0
libtpu: 0.0.40
codegen_flags: <defaults>
</compile_context>

<pallas_src>
import math
import jax
import jax.numpy as jnp
from jax.experimental import pallas as pl
from jax.experimental.pallas import tpu as pltpu

# ----------------------------- config ---------------------------------------
B, S, H, NH, FF, L, NCLS = 2, 8, 32, 4, 128, 2, 2
HD = H // NH
VOCAB, MAXPOS, NTYPES = 100, S + 4, 1
EPS = 1e-5
LOGIT_PAD = 128            # lane-dense logits slab width
OUT_SUBLANES = 8           # pad logits sublane dim to a full (8,128) tile
QK_SCALE = 1.0 / math.sqrt(HD)


# ----------------------------- kernel ----------------------------------------
def _layer_norm(x, g, b):
    mu = jnp.mean(x, axis=-1, keepdims=True)
    var = jnp.mean((x - mu) ** 2, axis=-1, keepdims=True)
    return (x - mu) * jax.lax.rsqrt(var + EPS) * g + b


def roberta_fused_kernel(emb_ref, mask_ref, eg_ref, eb_ref,
                         wqkv_ref, bqkv_ref, wo_ref, bo_ref, g1_ref, be1_ref,
                         w1_ref, b1_ref, w2_ref, b2_ref, g2_ref, be2_ref,
                         pw_ref, pb_ref, cw_ref, cb_ref,
                         out_ref, x_sc):
    """Whole RobertaClass forward.

    grid = (batch, layer); batch is 'parallel' (megacore), layer is sequential.
    """
    l = pl.program_id(1)

    # ---- prologue (layer 0): embeddings LayerNorm into the VMEM residual stream ----
    @pl.when(l == 0)
    def _():
        x_sc[...] = _layer_norm(emb_ref[0], eg_ref[...], eb_ref[...])

    x = x_sc[...]                                   # (S, H) f32 residual stream
    x_bf = x.astype(jnp.bfloat16)

    # ---- fused QKV projection (bf16 operands, f32 accumulation) ----
    qkv = jnp.dot(x_bf, wqkv_ref[0],
                  preferred_element_type=jnp.float32) + bqkv_ref[0]   # (S, 3H) f32

    # head-major layout: (NH, S, HD); attention scale applied here (keeps real
    # checkpoint Q biases correct).
    q = jnp.transpose((qkv[:, :H] * QK_SCALE).reshape(S, NH, HD),
                      (1, 0, 2)).astype(jnp.bfloat16)
    k = jnp.transpose(qkv[:, H:2 * H].reshape(S, NH, HD),
                      (1, 0, 2)).astype(jnp.bfloat16)
    v = jnp.transpose(qkv[:, 2 * H:3 * H].reshape(S, NH, HD),
                      (1, 0, 2)).astype(jnp.bfloat16)

    # in-kernel additive padding mask (HF-style -10000), applied in f32.
    addmask = (1.0 - mask_ref[0]) * -10000.0        # (1, S)

    # ---- per-batch multi-head attention: one head-batched matmul, no k transpose ----
    s = jnp.einsum('hqd,hkd->hqk', q, k,
                   preferred_element_type=jnp.float32)               # (NH, S, S)
    s = s + addmask
    s = s - jnp.max(s, axis=-1, keepdims=True)
    p = jnp.exp(s)
    p = p * pl.reciprocal(jnp.sum(p, axis=-1, keepdims=True), approx=True)
    ctx = jnp.einsum('hqk,hkd->hqd', p.astype(jnp.bfloat16), v,
                     preferred_element_type=jnp.float32)             # (NH, S, HD)
    ctx = jnp.transpose(ctx, (1, 0, 2)).reshape(S, H)

    attn = jnp.dot(ctx.astype(jnp.bfloat16), wo_ref[0],
                   preferred_element_type=jnp.float32) + bo_ref[0]
    h1 = _layer_norm(attn + x, g1_ref[0], be1_ref[0])

    # ---- feed-forward ----
    ff = jnp.dot(h1.astype(jnp.bfloat16), w1_ref[0],
                 preferred_element_type=jnp.float32) + b1_ref[0]
    # TODO(synk): HF RoBERTa uses the exact erf GELU; tanh approximation kept here
    # (erf is not guaranteed to lower in Mosaic) -> tiny numeric difference.
    ff = jax.nn.gelu(ff, approximate=True)
    ff = jnp.dot(ff.astype(jnp.bfloat16), w2_ref[0],
                 preferred_element_type=jnp.float32) + b2_ref[0]
    x_new = _layer_norm(ff + h1, g2_ref[0], be2_ref[0])
    x_sc[...] = x_new                               # residual stays in VMEM

    # ---- epilogue (last layer): pooler -> pre_classifier -> ReLU -> classifier ----
    @pl.when(l == L - 1)
    def _():
        pooler = x_new[0:1, :]                      # hidden_state[:, 0] for this batch row
        hp = jnp.dot(pooler.astype(jnp.bfloat16), pw_ref[...],
                     preferred_element_type=jnp.float32) + pb_ref[...]
        hp = jnp.maximum(hp, 0.0)                   # ReLU; dropout(p=0.3) is identity at inference
        logits = jnp.dot(hp.astype(jnp.bfloat16), cw_ref[...],
                         preferred_element_type=jnp.float32) + cb_ref[...]   # (1, 128)
        out_ref[...] = jnp.broadcast_to(logits[:, None, :],
                                        (1, OUT_SUBLANES, LOGIT_PAD))


# ----------------------------- wrapper ----------------------------------------
def _full_spec(shape):
    n = len(shape)
    return pl.BlockSpec(tuple(shape), lambda b, l, _n=n: (0,) * _n)


def _layer_spec(shape):
    n = len(shape)
    return pl.BlockSpec((1,) + tuple(shape[1:]),
                        lambda b, l, _n=n: (l,) + (0,) * (_n - 1))


def _batch_spec(shape):
    n = len(shape)
    return pl.BlockSpec((1,) + tuple(shape[1:]),
                        lambda b, l, _n=n: (b,) + (0,) * (_n - 1))


_PER_LAYER = ("wqkv", "bqkv", "wo", "bo", "ln1_g", "ln1_b",
              "w1", "b1", "w2", "b2", "ln2_g", "ln2_b")
_HEAD = ("pre_w", "pre_b", "cls_w", "cls_b")


def roberta_fused_call(emb3d, padmask3d, p):
    args = ([emb3d, padmask3d, p["emb_ln_g"], p["emb_ln_b"]]
            + [p[k] for k in _PER_LAYER] + [p[k] for k in _HEAD])
    in_specs = ([_batch_spec(emb3d.shape), _batch_spec(padmask3d.shape),
                 _full_spec(p["emb_ln_g"].shape), _full_spec(p["emb_ln_b"].shape)]
                + [_layer_spec(p[k].shape) for k in _PER_LAYER]
                + [_full_spec(p[k].shape) for k in _HEAD])
    return pl.pallas_call(
        roberta_fused_kernel,
        out_shape=jax.ShapeDtypeStruct((B, OUT_SUBLANES, LOGIT_PAD), jnp.float32),
        grid=(B, L),
        in_specs=in_specs,
        out_specs=pl.BlockSpec((1, OUT_SUBLANES, LOGIT_PAD), lambda b, l: (b, 0, 0)),
        scratch_shapes=[pltpu.VMEM((S, H), jnp.float32)],
        compiler_params=pltpu.CompilerParams(
            dimension_semantics=("parallel", "arbitrary")),
    )(*args)


# ----------------------------- params & forward --------------------------------
def init_params(key):
    ks = jax.random.split(key, 12)

    def nrm(k, shape, scale=0.02):
        return (scale * jax.random.normal(k, shape)).astype(jnp.float32)

    wq = nrm(ks[0], (L, H, H))
    wk = nrm(ks[1], (L, H, H))
    wv = nrm(ks[2], (L, H, H))

    cls_w = nrm(ks[6], (H, NCLS))
    cls_w_pad = jnp.pad(cls_w, ((0, 0), (0, LOGIT_PAD - NCLS)))   # lane-dense slab

    params = {
        "word_emb": nrm(ks[3], (VOCAB, H)),
        "pos_emb": nrm(ks[4], (MAXPOS, H)),
        "type_emb": nrm(ks[5], (NTYPES, H)),
        "emb_ln_g": jnp.ones((1, H), jnp.float32),
        "emb_ln_b": jnp.zeros((1, H), jnp.float32),
        # per-layer weights stacked on a leading L axis; matmul weights in bf16
        "wqkv": jnp.concatenate([wq, wk, wv], axis=-1).astype(jnp.bfloat16),
        "bqkv": jnp.zeros((L, 1, 3 * H), jnp.float32),
        "wo": nrm(ks[7], (L, H, H)).astype(jnp.bfloat16),
        "bo": jnp.zeros((L, 1, H), jnp.float32),
        "ln1_g": jnp.ones((L, 1, H), jnp.float32),
        "ln1_b": jnp.zeros((L, 1, H), jnp.float32),
        "w1": nrm(ks[8], (L, H, FF)).astype(jnp.bfloat16),
        "b1": jnp.zeros((L, 1, FF), jnp.float32),
        "w2": nrm(ks[9], (L, FF, H)).astype(jnp.bfloat16),
        "b2": jnp.zeros((L, 1, H), jnp.float32),
        "ln2_g": jnp.ones((L, 1, H), jnp.float32),
        "ln2_b": jnp.zeros((L, 1, H), jnp.float32),
        # classification head (pre_classifier 768x768 / classifier 768x2 analogue)
        "pre_w": nrm(ks[10], (H, H)).astype(jnp.bfloat16),
        "pre_b": jnp.zeros((1, H), jnp.float32),
        "cls_w": cls_w_pad.astype(jnp.bfloat16),
        "cls_b": jnp.zeros((1, LOGIT_PAD), jnp.float32),
    }
    return params


def roberta_class_forward(params, input_ids, attention_mask, token_type_ids):
    # Embedding gathers are data-dependent -> JAX glue. RoBERTa position ids are
    # derived from the mask (pad tokens keep padding_idx=1, others get cumsum+1).
    mask_f = attention_mask.astype(jnp.float32)
    pos_ids = (jnp.cumsum(attention_mask, axis=-1) * attention_mask + 1).astype(jnp.int32)
    emb = (jnp.take(params["word_emb"], input_ids, axis=0)
           + jnp.take(params["pos_emb"], pos_ids, axis=0)
           + jnp.take(params["type_emb"], token_type_ids, axis=0))
    emb3d = emb.reshape(B, S, H).astype(jnp.float32)

    # raw per-batch key padding mask; the additive -10000 mask is built in-kernel.
    padmask3d = mask_f.reshape(B, 1, S)

    logits_pad = roberta_fused_call(emb3d, padmask3d, params)   # (B, 8, 128)
    return logits_pad[:, 0, :NCLS]


# ----------------------------- main ---------------------------------------------
if __name__ == "__main__":
    key = jax.random.PRNGKey(0)
    pkey, ikey = jax.random.split(key)

    params = init_params(pkey)
    input_ids = jax.random.randint(ikey, (B, S), 3, VOCAB, dtype=jnp.int32)
    attention_mask = jnp.ones((B, S), dtype=jnp.int32).at[1, S - 2:].set(0)
    token_type_ids = jnp.zeros((B, S), dtype=jnp.int32)

    logits = roberta_class_forward(params, input_ids, attention_mask, token_type_ids)
    logits = jax.block_until_ready(logits)
    assert logits.shape == (B, NCLS) and logits.dtype == jnp.float32
    assert bool(jnp.all(jnp.isfinite(logits)))
    print("KERNEL_OK")
</pallas_src>

<mosaic_0001>
module attributes {stable_mosaic.version = 11 : i64} {
  func.func @roberta_fused_kernel(%arg0: i32, %arg1: i32, %arg2: memref<1x8x32xf32, #tpu.memory_space<vmem>>, %arg3: memref<1x1x8xf32, #tpu.memory_space<vmem>>, %arg4: memref<1x32xf32, #tpu.memory_space<vmem>>, %arg5: memref<1x32xf32, #tpu.memory_space<vmem>>, %arg6: memref<1x32x96xbf16, #tpu.memory_space<vmem>>, %arg7: memref<1x1x96xf32, #tpu.memory_space<vmem>>, %arg8: memref<1x32x32xbf16, #tpu.memory_space<vmem>>, %arg9: memref<1x1x32xf32, #tpu.memory_space<vmem>>, %arg10: memref<1x1x32xf32, #tpu.memory_space<vmem>>, %arg11: memref<1x1x32xf32, #tpu.memory_space<vmem>>, %arg12: memref<1x32x128xbf16, #tpu.memory_space<vmem>>, %arg13: memref<1x1x128xf32, #tpu.memory_space<vmem>>, %arg14: memref<1x128x32xbf16, #tpu.memory_space<vmem>>, %arg15: memref<1x1x32xf32, #tpu.memory_space<vmem>>, %arg16: memref<1x1x32xf32, #tpu.memory_space<vmem>>, %arg17: memref<1x1x32xf32, #tpu.memory_space<vmem>>, %arg18: memref<32x32xbf16, #tpu.memory_space<vmem>>, %arg19: memref<1x32xf32, #tpu.memory_space<vmem>>, %arg20: memref<32x128xbf16, #tpu.memory_space<vmem>>, %arg21: memref<1x128xf32, #tpu.memory_space<vmem>>, %arg22: memref<1x8x128xf32, #tpu.memory_space<vmem>>, %arg23: memref<8x32xf32, #tpu.memory_space<vmem>>) attributes {dimension_semantics = [#tpu.dimension_semantics<parallel>, #tpu.dimension_semantics<arbitrary>], iteration_bounds = array<i64: 2, 2>, scalar_prefetch = 0 : i64, scratch_operands = 1 : i64, tpu.core_type = #tpu.core_type<tc>, window_params = [{transform_indices = @transform_0, window_bounds = array<i64: 1, 8, 32>}, {transform_indices = @transform_1, window_bounds = array<i64: 1, 1, 8>}, {pipeline_mode = #tpu.pipeline_mode<synchronous>, transform_indices = @transform_2, window_bounds = array<i64: 1, 32>}, {pipeline_mode = #tpu.pipeline_mode<synchronous>, transform_indices = @transform_3, window_bounds = array<i64: 1, 32>}, {transform_indices = @transform_4, window_bounds = array<i64: 1, 32, 96>}, {transform_indices = @transform_5, window_bounds = array<i64: 1, 1, 96>}, {transform_indices = @transform_6, window_bounds = array<i64: 1, 32, 32>}, {transform_indices = @transform_7, window_bounds = array<i64: 1, 1, 32>}, {transform_indices = @transform_8, window_bounds = array<i64: 1, 1, 32>}, {transform_indices = @transform_9, window_bounds = array<i64: 1, 1, 32>}, {transform_indices = @transform_10, window_bounds = array<i64: 1, 32, 128>}, {transform_indices = @transform_11, window_bounds = array<i64: 1, 1, 128>}, {transform_indices = @transform_12, window_bounds = array<i64: 1, 128, 32>}, {transform_indices = @transform_13, window_bounds = array<i64: 1, 1, 32>}, {transform_indices = @transform_14, window_bounds = array<i64: 1, 1, 32>}, {transform_indices = @transform_15, window_bounds = array<i64: 1, 1, 32>}, {pipeline_mode = #tpu.pipeline_mode<synchronous>, transform_indices = @transform_16, window_bounds = array<i64: 32, 32>}, {pipeline_mode = #tpu.pipeline_mode<synchronous>, transform_indices = @transform_17, window_bounds = array<i64: 1, 32>}, {pipeline_mode = #tpu.pipeline_mode<synchronous>, transform_indices = @transform_18, window_bounds = array<i64: 32, 128>}, {pipeline_mode = #tpu.pipeline_mode<synchronous>, transform_indices = @transform_19, window_bounds = array<i64: 1, 128>}, {transform_indices = @transform_20, window_bounds = array<i64: 1, 8, 128>}]} {
    %c0_i32 = arith.constant 0 : i32
    %0 = arith.cmpi eq, %arg1, %c0_i32 : i32
    %1 = arith.extui %0 : i1 to i32
    %c0_i32_0 = arith.constant 0 : i32
    %2 = arith.cmpi ne, %1, %c0_i32_0 : i32
    scf.if %2 {
      %c0_68 = arith.constant 0 : index
      %c0_69 = arith.constant 0 : index
      %c0_70 = arith.constant 0 : index
      %145 = vector.load %arg2[%c0_68, %c0_69, %c0_70] : memref<1x8x32xf32, #tpu.memory_space<vmem>>, vector<1x8x32xf32>
      %146 = vector.shape_cast %145 : vector<1x8x32xf32> to vector<8x32xf32>
      %c0_71 = arith.constant 0 : index
      %c0_72 = arith.constant 0 : index
      %147 = vector.load %arg4[%c0_71, %c0_72] : memref<1x32xf32, #tpu.memory_space<vmem>>, vector<1x32xf32>
      %c0_73 = arith.constant 0 : index
      %c0_74 = arith.constant 0 : index
      %148 = vector.load %arg5[%c0_73, %c0_74] : memref<1x32xf32, #tpu.memory_space<vmem>>, vector<1x32xf32>
      %cst_75 = arith.constant dense<0.000000e+00> : vector<8xf32>
      %149 = vector.multi_reduction <add>, %146, %cst_75 [1] : vector<8x32xf32> to vector<8xf32>
      %150 = vector.shape_cast %149 : vector<8xf32> to vector<8x1xf32>
      %cst_76 = arith.constant 3.200000e+01 : f32
      %151 = vector.broadcast %cst_76 : f32 to vector<8x1xf32>
      %152 = arith.divf %150, %151 : vector<8x1xf32>
      %153 = vector.broadcast %152 : vector<8x1xf32> to vector<8x32xf32>
      %154 = arith.subf %146, %153 : vector<8x32xf32>
      %155 = arith.mulf %154, %154 : vector<8x32xf32>
      %cst_77 = arith.constant dense<0.000000e+00> : vector<8xf32>
      %156 = vector.multi_reduction <add>, %155, %cst_77 [1] : vector<8x32xf32> to vector<8xf32>
      %157 = vector.shape_cast %156 : vector<8xf32> to vector<8x1xf32>
      %cst_78 = arith.constant 3.200000e+01 : f32
      %158 = vector.broadcast %cst_78 : f32 to vector<8x1xf32>
      %159 = arith.divf %157, %158 : vector<8x1xf32>
      %160 = vector.broadcast %152 : vector<8x1xf32> to vector<8x32xf32>
      %161 = arith.subf %146, %160 : vector<8x32xf32>
      %cst_79 = arith.constant 9.99999974E-6 : f32
      %162 = vector.broadcast %cst_79 : f32 to vector<8x1xf32>
      %163 = arith.addf %159, %162 : vector<8x1xf32>
      %164 = math.rsqrt %163 : vector<8x1xf32>
      %165 = vector.broadcast %164 : vector<8x1xf32> to vector<8x32xf32>
      %166 = arith.mulf %161, %165 : vector<8x32xf32>
      %167 = vector.broadcast %147 : vector<1x32xf32> to vector<8x32xf32>
      %168 = arith.mulf %166, %167 : vector<8x32xf32>
      %169 = vector.broadcast %148 : vector<1x32xf32> to vector<8x32xf32>
      %170 = arith.addf %168, %169 : vector<8x32xf32>
      %c0_80 = arith.constant 0 : index
      %c0_81 = arith.constant 0 : index
      %171 = vector.load %arg23[%c0_80, %c0_81] : memref<8x32xf32, #tpu.memory_space<vmem>>, vector<8x32xf32>
      tpu.vector_store %arg23[%c0_80, %c0_81], %170 {strides = array<i32>} : memref<8x32xf32, #tpu.memory_space<vmem>>, vector<8x32xf32>,
    } else {
    }
    %c0 = arith.constant 0 : index
    %c0_1 = arith.constant 0 : index
    %3 = vector.load %arg23[%c0, %c0_1] : memref<8x32xf32, #tpu.memory_space<vmem>>, vector<8x32xf32>
    %4 = arith.truncf %3 : vector<8x32xf32> to vector<8x32xbf16>
    %c0_2 = arith.constant 0 : index
    %c0_3 = arith.constant 0 : index
    %c0_4 = arith.constant 0 : index
    %5 = vector.load %arg6[%c0_2, %c0_3, %c0_4] : memref<1x32x96xbf16, #tpu.memory_space<vmem>>, vector<1x32x96xbf16>
    %6 = vector.shape_cast %5 : vector<1x32x96xbf16> to vector<32x96xbf16>
    %cst = arith.constant dense<0.000000e+00> : vector<8x96xf32>
    %7 = tpu.matmul %4, %6, %cst {dimension_numbers = #tpu.dot_dimension_numbers<[1], [0], [0], [1], [0, 0, 1, 1], [], []>} : vector<8x32xbf16>, vector<32x96xbf16>, vector<8x96xf32> -> vector<8x96xf32>
    %c0_5 = arith.constant 0 : index
    %c0_6 = arith.constant 0 : index
    %c0_7 = arith.constant 0 : index
    %8 = vector.load %arg7[%c0_5, %c0_6, %c0_7] : memref<1x1x96xf32, #tpu.memory_space<vmem>>, vector<1x1x96xf32>
    %9 = vector.shape_cast %8 : vector<1x1x96xf32> to vector<1x96xf32>
    %10 = vector.broadcast %9 : vector<1x96xf32> to vector<8x96xf32>
    %11 = arith.addf %7, %10 : vector<8x96xf32>
    %12 = vector.extract_strided_slice %11 {offsets = [0, 0], sizes = [8, 32], strides = [1, 1]} : vector<8x96xf32> to vector<8x32xf32>
    %cst_8 = arith.constant 0.353553385 : f32
    %13 = vector.broadcast %cst_8 : f32 to vector<8x32xf32>
    %14 = arith.mulf %12, %13 : vector<8x32xf32>
    %15 = vector.shape_cast %14 : vector<8x32xf32> to vector<8x4x8xf32>
    %16 = tpu.transpose %15, [1, 0, 2] : vector<8x4x8xf32> -> vector<4x8x8xf32>
    %17 = arith.truncf %16 : vector<4x8x8xf32> to vector<4x8x8xbf16>
    %18 = vector.extract_strided_slice %11 {offsets = [0, 32], sizes = [8, 32], strides = [1, 1]} : vector<8x96xf32> to vector<8x32xf32>
    %19 = vector.shape_cast %18 : vector<8x32xf32> to vector<8x4x8xf32>
    %20 = tpu.transpose %19, [1, 0, 2] : vector<8x4x8xf32> -> vector<4x8x8xf32>
    %21 = arith.truncf %20 : vector<4x8x8xf32> to vector<4x8x8xbf16>
    %22 = vector.extract_strided_slice %11 {offsets = [0, 64], sizes = [8, 32], strides = [1, 1]} : vector<8x96xf32> to vector<8x32xf32>
    %23 = vector.shape_cast %22 : vector<8x32xf32> to vector<8x4x8xf32>
    %24 = tpu.transpose %23, [1, 0, 2] : vector<8x4x8xf32> -> vector<4x8x8xf32>
    %25 = arith.truncf %24 : vector<4x8x8xf32> to vector<4x8x8xbf16>
    %c0_9 = arith.constant 0 : index
    %c0_10 = arith.constant 0 : index
    %c0_11 = arith.constant 0 : index
    %26 = vector.load %arg3[%c0_9, %c0_10, %c0_11] : memref<1x1x8xf32, #tpu.memory_space<vmem>>, vector<1x1x8xf32>
    %27 = vector.shape_cast %26 : vector<1x1x8xf32> to vector<1x8xf32>
    %cst_12 = arith.constant 1.000000e+00 : f32
    %28 = vector.broadcast %cst_12 : f32 to vector<1x8xf32>
    %29 = arith.subf %28, %27 : vector<1x8xf32>
    %cst_13 = arith.constant -1.000000e+04 : f32
    %30 = vector.broadcast %cst_13 : f32 to vector<1x8xf32>
    %31 = arith.mulf %29, %30 : vector<1x8xf32>
    "tpu.trace_start"() <{level = 10 : i32, message = "hqd,hkd->hqk"}> : () -> ()
    %cst_14 = arith.constant dense<0.000000e+00> : vector<4x8x8xf32>
    %32 = tpu.matmul %17, %21, %cst_14 {dimension_numbers = #tpu.dot_dimension_numbers<[2], [2], [1], [1], [0, 0, 0, 1, 1, 1], [0], [0]>} : vector<4x8x8xbf16>, vector<4x8x8xbf16>, vector<4x8x8xf32> -> vector<4x8x8xf32>
    "tpu.trace_stop"() : () -> ()
    %33 = vector.shape_cast %31 : vector<1x8xf32> to vector<1x1x8xf32>
    %34 = vector.broadcast %33 : vector<1x1x8xf32> to vector<4x8x8xf32>
    %35 = arith.addf %32, %34 : vector<4x8x8xf32>
    %cst_15 = arith.constant dense<0xFF800000> : vector<4x8xf32>
    %36 = vector.multi_reduction <maximumf>, %35, %cst_15 [2] : vector<4x8x8xf32> to vector<4x8xf32>
    %37 = vector.shape_cast %36 : vector<4x8xf32> to vector<4x8x1xf32>
    %38 = vector.broadcast %37 : vector<4x8x1xf32> to vector<4x8x8xf32>
    %39 = arith.subf %35, %38 : vector<4x8x8xf32>
    %40 = math.exp %39 : vector<4x8x8xf32>
    %cst_16 = arith.constant dense<0.000000e+00> : vector<4x8xf32>
    %41 = vector.multi_reduction <add>, %40, %cst_16 [2] : vector<4x8x8xf32> to vector<4x8xf32>
    %42 = vector.shape_cast %41 : vector<4x8xf32> to vector<4x8x1xf32>
    %43 = tpu.reciprocal %42 {approx = true} : vector<4x8x1xf32> -> vector<4x8x1xf32>
    %44 = vector.broadcast %43 : vector<4x8x1xf32> to vector<4x8x8xf32>
    %45 = arith.mulf %40, %44 : vector<4x8x8xf32>
    %46 = arith.truncf %45 : vector<4x8x8xf32> to vector<4x8x8xbf16>
    "tpu.trace_start"() <{level = 10 : i32, message = "hqk,hkd->hqd"}> : () -> ()
    %cst_17 = arith.constant dense<0.000000e+00> : vector<4x8x8xf32>
    %47 = tpu.matmul %46, %25, %cst_17 {dimension_numbers = #tpu.dot_dimension_numbers<[2], [1], [1], [2], [0, 0, 0, 1, 1, 2], [0], [0]>} : vector<4x8x8xbf16>, vector<4x8x8xbf16>, vector<4x8x8xf32> -> vector<4x8x8xf32>
    "tpu.trace_stop"() : () -> ()
    %48 = tpu.transpose %47, [1, 0, 2] : vector<4x8x8xf32> -> vector<8x4x8xf32>
    %49 = vector.shape_cast %48 : vector<8x4x8xf32> to vector<8x32xf32>
    %50 = arith.truncf %49 : vector<8x32xf32> to vector<8x32xbf16>
    %c0_18 = arith.constant 0 : index
    %c0_19 = arith.constant 0 : index
    %c0_20 = arith.constant 0 : index
    %51 = vector.load %arg8[%c0_18, %c0_19, %c0_20] : memref<1x32x32xbf16, #tpu.memory_space<vmem>>, vector<1x32x32xbf16>
    %52 = vector.shape_cast %51 : vector<1x32x32xbf16> to vector<32x32xbf16>
    %cst_21 = arith.constant dense<0.000000e+00> : vector<8x32xf32>
    %53 = tpu.matmul %50, %52, %cst_21 {dimension_numbers = #tpu.dot_dimension_numbers<[1], [0], [0], [1], [0, 0, 1, 1], [], []>} : vector<8x32xbf16>, vector<32x32xbf16>, vector<8x32xf32> -> vector<8x32xf32>
    %c0_22 = arith.constant 0 : index
    %c0_23 = arith.constant 0 : index
    %c0_24 = arith.constant 0 : index
    %54 = vector.load %arg9[%c0_22, %c0_23, %c0_24] : memref<1x1x32xf32, #tpu.memory_space<vmem>>, vector<1x1x32xf32>
    %55 = vector.shape_cast %54 : vector<1x1x32xf32> to vector<1x32xf32>
    %56 = vector.broadcast %55 : vector<1x32xf32> to vector<8x32xf32>
    %57 = arith.addf %53, %56 : vector<8x32xf32>
    %58 = arith.addf %57, %3 : vector<8x32xf32>
    %c0_25 = arith.constant 0 : index
    %c0_26 = arith.constant 0 : index
    %c0_27 = arith.constant 0 : index
    %59 = vector.load %arg10[%c0_25, %c0_26, %c0_27] : memref<1x1x32xf32, #tpu.memory_space<vmem>>, vector<1x1x32xf32>
    %60 = vector.shape_cast %59 : vector<1x1x32xf32> to vector<1x32xf32>
    %c0_28 = arith.constant 0 : index
    %c0_29 = arith.constant 0 : index
    %c0_30 = arith.constant 0 : index
    %61 = vector.load %arg11[%c0_28, %c0_29, %c0_30] : memref<1x1x32xf32, #tpu.memory_space<vmem>>, vector<1x1x32xf32>
    %62 = vector.shape_cast %61 : vector<1x1x32xf32> to vector<1x32xf32>
    %cst_31 = arith.constant dense<0.000000e+00> : vector<8xf32>
    %63 = vector.multi_reduction <add>, %58, %cst_31 [1] : vector<8x32xf32> to vector<8xf32>
    %64 = vector.shape_cast %63 : vector<8xf32> to vector<8x1xf32>
    %cst_32 = arith.constant 3.200000e+01 : f32
    %65 = vector.broadcast %cst_32 : f32 to vector<8x1xf32>
    %66 = arith.divf %64, %65 : vector<8x1xf32>
    %67 = vector.broadcast %66 : vector<8x1xf32> to vector<8x32xf32>
    %68 = arith.subf %58, %67 : vector<8x32xf32>
    %69 = arith.mulf %68, %68 : vector<8x32xf32>
    %cst_33 = arith.constant dense<0.000000e+00> : vector<8xf32>
    %70 = vector.multi_reduction <add>, %69, %cst_33 [1] : vector<8x32xf32> to vector<8xf32>
    %71 = vector.shape_cast %70 : vector<8xf32> to vector<8x1xf32>
    %cst_34 = arith.constant 3.200000e+01 : f32
    %72 = vector.broadcast %cst_34 : f32 to vector<8x1xf32>
    %73 = arith.divf %71, %72 : vector<8x1xf32>
    %74 = vector.broadcast %66 : vector<8x1xf32> to vector<8x32xf32>
    %75 = arith.subf %58, %74 : vector<8x32xf32>
    %cst_35 = arith.constant 9.99999974E-6 : f32
    %76 = vector.broadcast %cst_35 : f32 to vector<8x1xf32>
    %77 = arith.addf %73, %76 : vector<8x1xf32>
    %78 = math.rsqrt %77 : vector<8x1xf32>
    %79 = vector.broadcast %78 : vector<8x1xf32> to vector<8x32xf32>
    %80 = arith.mulf %75, %79 : vector<8x32xf32>
    %81 = vector.broadcast %60 : vector<1x32xf32> to vector<8x32xf32>
    %82 = arith.mulf %80, %81 : vector<8x32xf32>
    %83 = vector.broadcast %62 : vector<1x32xf32> to vector<8x32xf32>
    %84 = arith.addf %82, %83 : vector<8x32xf32>
    %85 = arith.truncf %84 : vector<8x32xf32> to vector<8x32xbf16>
    %c0_36 = arith.constant 0 : index
    %c0_37 = arith.constant 0 : index
    %c0_38 = arith.constant 0 : index
    %86 = vector.load %arg12[%c0_36, %c0_37, %c0_38] : memref<1x32x128xbf16, #tpu.memory_space<vmem>>, vector<1x32x128xbf16>
    %87 = vector.shape_cast %86 : vector<1x32x128xbf16> to vector<32x128xbf16>
    %cst_39 = arith.constant dense<0.000000e+00> : vector<8x128xf32>
    %88 = tpu.matmul %85, %87, %cst_39 {dimension_numbers = #tpu.dot_dimension_numbers<[1], [0], [0], [1], [0, 0, 1, 1], [], []>} : vector<8x32xbf16>, vector<32x128xbf16>, vector<8x128xf32> -> vector<8x128xf32>
    %c0_40 = arith.constant 0 : index
    %c0_41 = arith.constant 0 : index
    %c0_42 = arith.constant 0 : index
    %89 = vector.load %arg13[%c0_40, %c0_41, %c0_42] : memref<1x1x128xf32, #tpu.memory_space<vmem>>, vector<1x1x128xf32>
    %90 = vector.shape_cast %89 : vector<1x1x128xf32> to vector<1x128xf32>
    %91 = vector.broadcast %90 : vector<1x128xf32> to vector<8x128xf32>
    %92 = arith.addf %88, %91 : vector<8x128xf32>
    %93 = arith.mulf %92, %92 : vector<8x128xf32>
    %94 = arith.mulf %92, %93 : vector<8x128xf32>
    %cst_43 = arith.constant 4.471500e-02 : f32
    %95 = vector.broadcast %cst_43 : f32 to vector<8x128xf32>
    %96 = arith.mulf %95, %94 : vector<8x128xf32>
    %97 = arith.addf %92, %96 : vector<8x128xf32>
    %cst_44 = arith.constant 0.797884583 : f32
    %98 = vector.broadcast %cst_44 : f32 to vector<8x128xf32>
    %99 = arith.mulf %98, %97 : vector<8x128xf32>
    %100 = math.tanh %99 : vector<8x128xf32>
    %cst_45 = arith.constant 1.000000e+00 : f32
    %101 = vector.broadcast %cst_45 : f32 to vector<8x128xf32>
    %102 = arith.addf %101, %100 : vector<8x128xf32>
    %cst_46 = arith.constant 5.000000e-01 : f32
    %103 = vector.broadcast %cst_46 : f32 to vector<8x128xf32>
    %104 = arith.mulf %103, %102 : vector<8x128xf32>
    %105 = arith.mulf %92, %104 : vector<8x128xf32>
    %106 = arith.truncf %105 : vector<8x128xf32> to vector<8x128xbf16>
    %c0_47 = arith.constant 0 : index
    %c0_48 = arith.constant 0 : index
    %c0_49 = arith.constant 0 : index
    %107 = vector.load %arg14[%c0_47, %c0_48, %c0_49] : memref<1x128x32xbf16, #tpu.memory_space<vmem>>, vector<1x128x32xbf16>
    %108 = vector.shape_cast %107 : vector<1x128x32xbf16> to vector<128x32xbf16>
    %cst_50 = arith.constant dense<0.000000e+00> : vector<8x32xf32>
    %109 = tpu.matmul %106, %108, %cst_50 {dimension_numbers = #tpu.dot_dimension_numbers<[1], [0], [0], [1], [0, 0, 1, 1], [], []>} : vector<8x128xbf16>, vector<128x32xbf16>, vector<8x32xf32> -> vector<8x32xf32>
    %c0_51 = arith.constant 0 : index
    %c0_52 = arith.constant 0 : index
    %c0_53 = arith.constant 0 : index
    %110 = vector.load %arg15[%c0_51, %c0_52, %c0_53] : memref<1x1x32xf32, #tpu.memory_space<vmem>>, vector<1x1x32xf32>
    %111 = vector.shape_cast %110 : vector<1x1x32xf32> to vector<1x32xf32>
    %112 = vector.broadcast %111 : vector<1x32xf32> to vector<8x32xf32>
    %113 = arith.addf %109, %112 : vector<8x32xf32>
    %114 = arith.addf %113, %84 : vector<8x32xf32>
    %c0_54 = arith.constant 0 : index
    %c0_55 = arith.constant 0 : index
    %c0_56 = arith.constant 0 : index
    %115 = vector.load %arg16[%c0_54, %c0_55, %c0_56] : memref<1x1x32xf32, #tpu.memory_space<vmem>>, vector<1x1x32xf32>
    %116 = vector.shape_cast %115 : vector<1x1x32xf32> to vector<1x32xf32>
    %c0_57 = arith.constant 0 : index
    %c0_58 = arith.constant 0 : index
    %c0_59 = arith.constant 0 : index
    %117 = vector.load %arg17[%c0_57, %c0_58, %c0_59] : memref<1x1x32xf32, #tpu.memory_space<vmem>>, vector<1x1x32xf32>
    %118 = vector.shape_cast %117 : vector<1x1x32xf32> to vector<1x32xf32>
    %cst_60 = arith.constant dense<0.000000e+00> : vector<8xf32>
    %119 = vector.multi_reduction <add>, %114, %cst_60 [1] : vector<8x32xf32> to vector<8xf32>
    %120 = vector.shape_cast %119 : vector<8xf32> to vector<8x1xf32>
    %cst_61 = arith.constant 3.200000e+01 : f32
    %121 = vector.broadcast %cst_61 : f32 to vector<8x1xf32>
    %122 = arith.divf %120, %121 : vector<8x1xf32>
    %123 = vector.broadcast %122 : vector<8x1xf32> to vector<8x32xf32>
    %124 = arith.subf %114, %123 : vector<8x32xf32>
    %125 = arith.mulf %124, %124 : vector<8x32xf32>
    %cst_62 = arith.constant dense<0.000000e+00> : vector<8xf32>
    %126 = vector.multi_reduction <add>, %125, %cst_62 [1] : vector<8x32xf32> to vector<8xf32>
    %127 = vector.shape_cast %126 : vector<8xf32> to vector<8x1xf32>
    %cst_63 = arith.constant 3.200000e+01 : f32
    %128 = vector.broadcast %cst_63 : f32 to vector<8x1xf32>
    %129 = arith.divf %127, %128 : vector<8x1xf32>
    %130 = vector.broadcast %122 : vector<8x1xf32> to vector<8x32xf32>
    %131 = arith.subf %114, %130 : vector<8x32xf32>
    %cst_64 = arith.constant 9.99999974E-6 : f32
    %132 = vector.broadcast %cst_64 : f32 to vector<8x1xf32>
    %133 = arith.addf %129, %132 : vector<8x1xf32>
    %134 = math.rsqrt %133 : vector<8x1xf32>
    %135 = vector.broadcast %134 : vector<8x1xf32> to vector<8x32xf32>
    %136 = arith.mulf %131, %135 : vector<8x32xf32>
    %137 = vector.broadcast %116 : vector<1x32xf32> to vector<8x32xf32>
    %138 = arith.mulf %136, %137 : vector<8x32xf32>
    %139 = vector.broadcast %118 : vector<1x32xf32> to vector<8x32xf32>
    %140 = arith.addf %138, %139 : vector<8x32xf32>
    %c0_65 = arith.constant 0 : index
    %c0_66 = arith.constant 0 : index
    %141 = vector.load %arg23[%c0_65, %c0_66] : memref<8x32xf32, #tpu.memory_space<vmem>>, vector<8x32xf32>
    tpu.vector_store %arg23[%c0_65, %c0_66], %140 {strides = array<i32>} : memref<8x32xf32, #tpu.memory_space<vmem>>, vector<8x32xf32>,
    %c1_i32 = arith.constant 1 : i32
    %142 = arith.cmpi eq, %arg1, %c1_i32 : i32
    %143 = arith.extui %142 : i1 to i32
    %c0_i32_67 = arith.constant 0 : i32
    %144 = arith.cmpi ne, %143, %c0_i32_67 : i32
    scf.if %144 {
      %145 = vector.extract_strided_slice %140 {offsets = [0, 0], sizes = [1, 32], strides = [1, 1]} : vector<8x32xf32> to vector<1x32xf32>
      %146 = arith.truncf %145 : vector<1x32xf32> to vector<1x32xbf16>
      %c0_68 = arith.constant 0 : index
      %c0_69 = arith.constant 0 : index
      %147 = vector.load %arg18[%c0_68, %c0_69] : memref<32x32xbf16, #tpu.memory_space<vmem>>, vector<32x32xbf16>
      %cst_70 = arith.constant dense<0.000000e+00> : vector<1x32xf32>
      %148 = tpu.matmul %146, %147, %cst_70 {dimension_numbers = #tpu.dot_dimension_numbers<[1], [0], [0], [1], [0, 0, 1, 1], [], []>} : vector<1x32xbf16>, vector<32x32xbf16>, vector<1x32xf32> -> vector<1x32xf32>
      %c0_71 = arith.constant 0 : index
      %c0_72 = arith.constant 0 : index
      %149 = vector.load %arg19[%c0_71, %c0_72] : memref<1x32xf32, #tpu.memory_space<vmem>>, vector<1x32xf32>
      %150 = arith.addf %148, %149 : vector<1x32xf32>
      %cst_73 = arith.constant 0.000000e+00 : f32
      %151 = vector.broadcast %cst_73 : f32 to vector<1x32xf32>
      %152 = arith.maximumf %150, %151 : vector<1x32xf32>
      %153 = arith.truncf %152 : vector<1x32xf32> to vector<1x32xbf16>
      %c0_74 = arith.constant 0 : index
      %c0_75 = arith.constant 0 : index
      %154 = vector.load %arg20[%c0_74, %c0_75] : memref<32x128xbf16, #tpu.memory_space<vmem>>, vector<32x128xbf16>
      %cst_76 = arith.constant dense<0.000000e+00> : vector<1x128xf32>
      %155 = tpu.matmul %153, %154, %cst_76 {dimension_numbers = #tpu.dot_dimension_numbers<[1], [0], [0], [1], [0, 0, 1, 1], [], []>} : vector<1x32xbf16>, vector<32x128xbf16>, vector<1x128xf32> -> vector<1x128xf32>
      %c0_77 = arith.constant 0 : index
      %c0_78 = arith.constant 0 : index
      %156 = vector.load %arg21[%c0_77, %c0_78] : memref<1x128xf32, #tpu.memory_space<vmem>>, vector<1x128xf32>
      %157 = arith.addf %155, %156 : vector<1x128xf32>
      %158 = vector.shape_cast %157 : vector<1x128xf32> to vector<1x1x128xf32>
      %159 = vector.shape_cast %158 : vector<1x1x128xf32> to vector<1x1x128xf32>
      %160 = vector.broadcast %159 : vector<1x1x128xf32> to vector<1x8x128xf32>
      %c0_79 = arith.constant 0 : index
      %c0_80 = arith.constant 0 : index
      %c0_81 = arith.constant 0 : index
      %161 = vector.load %arg22[%c0_79, %c0_80, %c0_81] : memref<1x8x128xf32, #tpu.memory_space<vmem>>, vector<1x8x128xf32>
      tpu.vector_store %arg22[%c0_79, %c0_80, %c0_81], %160 {strides = array<i32>} : memref<1x8x128xf32, #tpu.memory_space<vmem>>, vector<1x8x128xf32>,
    } else {
    }
    return
  }
  func.func @transform_0(%arg0: i32, %arg1: i32) -> (i32, i32, i32) {
    %c0_i32 = arith.constant 0 : i32
    %c0_i32_0 = arith.constant 0 : i32
    %c0_i32_1 = arith.constant 0 : i32
    return %arg0, %c0_i32, %c0_i32_0 : i32, i32, i32
  }
  func.func @transform_1(%arg0: i32, %arg1: i32) -> (i32, i32, i32) {
    %c0_i32 = arith.constant 0 : i32
    %c0_i32_0 = arith.constant 0 : i32
    %c0_i32_1 = arith.constant 0 : i32
    return %arg0, %c0_i32, %c0_i32_0 : i32, i32, i32
  }
  func.func @transform_2(%arg0: i32, %arg1: i32) -> (i32, i32) {
    %c0_i32 = arith.constant 0 : i32
    %c0_i32_0 = arith.constant 0 : i32
    %c0_i32_1 = arith.constant 0 : i32
    return %c0_i32, %c0_i32_0 : i32, i32
  }
  func.func @transform_3(%arg0: i32, %arg1: i32) -> (i32, i32) {
    %c0_i32 = arith.constant 0 : i32
    %c0_i32_0 = arith.constant 0 : i32
    %c0_i32_1 = arith.constant 0 : i32
    return %c0_i32, %c0_i32_0 : i32, i32
  }
  func.func @transform_4(%arg0: i32, %arg1: i32) -> (i32, i32, i32) {
    %c0_i32 = arith.constant 0 : i32
    %c0_i32_0 = arith.constant 0 : i32
    %c0_i32_1 = arith.constant 0 : i32
    return %arg1, %c0_i32, %c0_i32_0 : i32, i32, i32
  }
  func.func @transform_5(%arg0: i32, %arg1: i32) -> (i32, i32, i32) {
    %c0_i32 = arith.constant 0 : i32
    %c0_i32_0 = arith.constant 0 : i32
    %c0_i32_1 = arith.constant 0 : i32
    return %arg1, %c0_i32, %c0_i32_0 : i32, i32, i32
  }
  func.func @transform_6(%arg0: i32, %arg1: i32) -> (i32, i32, i32) {
    %c0_i32 = arith.constant 0 : i32
    %c0_i32_0 = arith.constant 0 : i32
    %c0_i32_1 = arith.constant 0 : i32
    return %arg1, %c0_i32, %c0_i32_0 : i32, i32, i32
  }
  func.func @transform_7(%arg0: i32, %arg1: i32) -> (i32, i32, i32) {
    %c0_i32 = arith.constant 0 : i32
    %c0_i32_0 = arith.constant 0 : i32
    %c0_i32_1 = arith.constant 0 : i32
    return %arg1, %c0_i32, %c0_i32_0 : i32, i32, i32
  }
  func.func @transform_8(%arg0: i32, %arg1: i32) -> (i32, i32, i32) {
    %c0_i32 = arith.constant 0 : i32
    %c0_i32_0 = arith.constant 0 : i32
    %c0_i32_1 = arith.constant 0 : i32
    return %arg1, %c0_i32, %c0_i32_0 : i32, i32, i32
  }
  func.func @transform_9(%arg0: i32, %arg1: i32) -> (i32, i32, i32) {
    %c0_i32 = arith.constant 0 : i32
    %c0_i32_0 = arith.constant 0 : i32
    %c0_i32_1 = arith.constant 0 : i32
    return %arg1, %c0_i32, %c0_i32_0 : i32, i32, i32
  }
  func.func @transform_10(%arg0: i32, %arg1: i32) -> (i32, i32, i32) {
    %c0_i32 = arith.constant 0 : i32
    %c0_i32_0 = arith.constant 0 : i32
    %c0_i32_1 = arith.constant 0 : i32
    return %arg1, %c0_i32, %c0_i32_0 : i32, i32, i32
  }
  func.func @transform_11(%arg0: i32, %arg1: i32) -> (i32, i32, i32) {
    %c0_i32 = arith.constant 0 : i32
    %c0_i32_0 = arith.constant 0 : i32
    %c0_i32_1 = arith.constant 0 : i32
    return %arg1, %c0_i32, %c0_i32_0 : i32, i32, i32
  }
  func.func @transform_12(%arg0: i32, %arg1: i32) -> (i32, i32, i32) {
    %c0_i32 = arith.constant 0 : i32
    %c0_i32_0 = arith.constant 0 : i32
    %c0_i32_1 = arith.constant 0 : i32
    return %arg1, %c0_i32, %c0_i32_0 : i32, i32, i32
  }
  func.func @transform_13(%arg0: i32, %arg1: i32) -> (i32, i32, i32) {
    %c0_i32 = arith.constant 0 : i32
    %c0_i32_0 = arith.constant 0 : i32
    %c0_i32_1 = arith.constant 0 : i32
    return %arg1, %c0_i32, %c0_i32_0 : i32, i32, i32
  }
  func.func @transform_14(%arg0: i32, %arg1: i32) -> (i32, i32, i32) {
    %c0_i32 = arith.constant 0 : i32
    %c0_i32_0 = arith.constant 0 : i32
    %c0_i32_1 = arith.constant 0 : i32
    return %arg1, %c0_i32, %c0_i32_0 : i32, i32, i32
  }
  func.func @transform_15(%arg0: i32, %arg1: i32) -> (i32, i32, i32) {
    %c0_i32 = arith.constant 0 : i32
    %c0_i32_0 = arith.constant 0 : i32
    %c0_i32_1 = arith.constant 0 : i32
    return %arg1, %c0_i32, %c0_i32_0 : i32, i32, i32
  }
  func.func @transform_16(%arg0: i32, %arg1: i32) -> (i32, i32) {
    %c0_i32 = arith.constant 0 : i32
    %c0_i32_0 = arith.constant 0 : i32
    %c0_i32_1 = arith.constant 0 : i32
    return %c0_i32, %c0_i32_0 : i32, i32
  }
  func.func @transform_17(%arg0: i32, %arg1: i32) -> (i32, i32) {
    %c0_i32 = arith.constant 0 : i32
    %c0_i32_0 = arith.constant 0 : i32
    %c0_i32_1 = arith.constant 0 : i32
    return %c0_i32, %c0_i32_0 : i32, i32
  }
  func.func @transform_18(%arg0: i32, %arg1: i32) -> (i32, i32) {
    %c0_i32 = arith.constant 0 : i32
    %c0_i32_0 = arith.constant 0 : i32
    %c0_i32_1 = arith.constant 0 : i32
    return %c0_i32, %c0_i32_0 : i32, i32
  }
  func.func @transform_19(%arg0: i32, %arg1: i32) -> (i32, i32) {
    %c0_i32 = arith.constant 0 : i32
    %c0_i32_0 = arith.constant 0 : i32
    %c0_i32_1 = arith.constant 0 : i32
    return %c0_i32, %c0_i32_0 : i32, i32
  }
  func.func @transform_20(%arg0: i32, %arg1: i32) -> (i32, i32, i32) {
    %c0_i32 = arith.constant 0 : i32
    %c0_i32_0 = arith.constant 0 : i32
    %c0_i32_1 = arith.constant 0 : i32
    return %arg0, %c0_i32, %c0_i32_0 : i32, i32, i32
  }
}

</mosaic_0001>

<llo_original>
// kernel: tpu_custom_call.1
$region0: #{tpu_custom_call.1}
  #allocation0 [shape = 'u32[]', space=smem, size = 0x4, offset = 0x4, fixed_abs, tag = 'smem constant byte address 0x4 - core index']
  #allocation1 [shape = 'u32[144,128]{1,0:T(1,128)}', space=vmem, size = 0x12000, scoped, tag = 'internal scratch']
  #allocation2 [shape = 'f32[8,32]{1,0:T(8,128)}', space=vmem, size = 0x1000, scoped, tag = 'scratch operand']
  %s0 = inlined_call_operand.vmem [shape: f32[2,8,32], index: 0, kind: input, shape index: {}]
  %s1 = inlined_call_operand.vmem [shape: f32[2,1,8], index: 1, kind: input, shape index: {}]
  %s2 = inlined_call_operand.vmem [shape: f32[1,32], index: 2, kind: input, shape index: {}]
  %s3 = inlined_call_operand.vmem [shape: f32[1,32], index: 3, kind: input, shape index: {}]
  %s4 = inlined_call_operand.vmem [shape: bf16[2,32,96], index: 4, kind: input, shape index: {}]
  %s5 = inlined_call_operand.vmem [shape: f32[2,1,96], index: 5, kind: input, shape index: {}]
  %s6 = inlined_call_operand.vmem [shape: bf16[2,32,32], index: 6, kind: input, shape index: {}]
  %s7 = inlined_call_operand.vmem [shape: f32[2,1,32], index: 7, kind: input, shape index: {}]
  %s8 = inlined_call_operand.vmem [shape: f32[2,1,32], index: 8, kind: input, shape index: {}]
  %s9 = inlined_call_operand.vmem [shape: f32[2,1,32], index: 9, kind: input, shape index: {}]
  %s10 = inlined_call_operand.vmem [shape: bf16[2,32,128], index: 10, kind: input, shape index: {}]
  %s11 = inlined_call_operand.vmem [shape: f32[2,1,128], index: 11, kind: input, shape index: {}]
  %s12 = inlined_call_operand.vmem [shape: bf16[2,128,32], index: 12, kind: input, shape index: {}]
  %s13 = inlined_call_operand.vmem [shape: f32[2,1,32], index: 13, kind: input, shape index: {}]
  %s14 = inlined_call_operand.vmem [shape: f32[2,1,32], index: 14, kind: input, shape index: {}]
  %s15 = inlined_call_operand.vmem [shape: f32[2,1,32], index: 15, kind: input, shape index: {}]
  %s16 = inlined_call_operand.vmem [shape: bf16[32,32], index: 16, kind: input, shape index: {}]
  %s17 = inlined_call_operand.vmem [shape: f32[1,32], index: 17, kind: input, shape index: {}]
  %s18 = inlined_call_operand.vmem [shape: bf16[32,128], index: 18, kind: input, shape index: {}]
  %s19 = inlined_call_operand.vmem [shape: f32[1,128], index: 19, kind: input, shape index: {}]
  %s20 = inlined_call_operand.hbm [shape: f32[2,8,128], index: 20, kind: output, shape index: {}]
  %s21 = sld [smem:[#allocation0]]
  $region121: #{tpu_custom_call.1} parent=0
    _
  %s23 = ssub.s32 1, %s21
  %s24 = scalar_select 0, %s23, %s21
  $region1: #{tpu_custom_call.1} parent=0
    #allocation3 [shape = 'u8[8192]{0}', space=vmem, size = 0x2000, scoped, tag = 'output window, operand 0']
    #allocation4 [shape = 's32[2]{0}', space=sflag, size = 0x8, scoped, tag = 'scoped memory for tpu_custom_call.1']
    %25 = vsyncpa [#allocation4], 0
    %s26 = scalar_lea.sflag [#allocation4], 1
    %27 = vsyncpa %s26, 0
    loop: start=0, step=1, limit=6
    $region2: #{tpu_custom_call.1} parent=1 // loop_pre_header
      _
    $region3: #{tpu_custom_call.1} parent=1 // loop_header
      %s29 = sphi 0, %s33
      %p30 = scmp.ge.s32.totalorder %s29, 6
      %s36 = sphi 0, %s48
      %s37 = sphi 0, %s44
      %s38 = sphi 0, %s36
      %s39 = sphi 0, %s37
      %s40 = sphi 0, %s38
      %s41 = sphi 0, %s39
      %s51 = sphi 0, %s53
      %s54 = sphi 0, %s51
      %s55 = sphi 0, %s54
      %s71 = sphi 0, %s55
      %s77 = sphi 0, %s79
      %s80 = sphi 0, %s77
      %s81 = sphi 0, %s80
      %s97 = sphi 0, %s81
      %s101 = sphi 0, %s101
      %s103 = sphi 0, %s101
      %s104 = sphi 0, %s103
      %s118 = sphi 0, %s104
      %s122 = sphi 0, %s122
      %s124 = sphi 0, %s122
      %s125 = sphi 0, %s124
      %s139 = sphi 0, %s125
      %s145 = sphi 0, %s147
      %s148 = sphi 0, %s145
      %s149 = sphi 0, %s148
      %s165 = sphi 0, %s149
      %s171 = sphi 0, %s173
      %s174 = sphi 0, %s171
      %s175 = sphi 0, %s174
      %s191 = sphi 0, %s175
      %s197 = sphi 0, %s199
      %s200 = sphi 0, %s197
      %s201 = sphi 0, %s200
      %s217 = sphi 0, %s201
      %s223 = sphi 0, %s225
      %s226 = sphi 0, %s223
      %s227 = sphi 0, %s226
      %s243 = sphi 0, %s227
      %s249 = sphi 0, %s251
      %s252 = sphi 0, %s249
      %s253 = sphi 0, %s252
      %s269 = sphi 0, %s253
      %s275 = sphi 0, %s277
      %s278 = sphi 0, %s275
      %s279 = sphi 0, %s278
      %s295 = sphi 0, %s279
      %s301 = sphi 0, %s303
      %s304 = sphi 0, %s301
      %s305 = sphi 0, %s304
      %s321 = sphi 0, %s305
      %s327 = sphi 0, %s329
      %s330 = sphi 0, %s327
      %s331 = sphi 0, %s330
      %s347 = sphi 0, %s331
      %s353 = sphi 0, %s355
      %s356 = sphi 0, %s353
      %s357 = sphi 0, %s356
      %s373 = sphi 0, %s357
      %s379 = sphi 0, %s381
      %s382 = sphi 0, %s379
      %s383 = sphi 0, %s382
      %s399 = sphi 0, %s383
      %s405 = sphi 0, %s407
      %s408 = sphi 0, %s405
      %s409 = sphi 0, %s408
      %s425 = sphi 0, %s409
      %s431 = sphi 0, %s433
      %s434 = sphi 0, %s431
      %s435 = sphi 0, %s434
      %s451 = sphi 0, %s435
      %s455 = sphi 0, %s455
      %s457 = sphi 0, %s455
      %s458 = sphi 0, %s457
      %s472 = sphi 0, %s458
      %s476 = sphi 0, %s476
      %s478 = sphi 0, %s476
      %s479 = sphi 0, %s478
      %s493 = sphi 0, %s479
      %s497 = sphi 0, %s497
      %s499 = sphi 0, %s497
      %s500 = sphi 0, %s499
      %s514 = sphi 0, %s500
      %s518 = sphi 0, %s518
      %s520 = sphi 0, %s518
      %s521 = sphi 0, %s520
      %s535 = sphi 0, %s521
      %s541 = sphi 0, %s543
      %s544 = sphi 0, %s541
      %s545 = sphi 0, %s544
      %s561 = sphi 0, %s545
    $region4: #{tpu_custom_call.1} parent=1 // loop_header_branch
      %32 = sbr.rel (%p30) target = $region8
    $region5: #{tpu_custom_call.1} parent=1 // loop_body
      %s34 = ssub.s32 %s29, 1
      %s35 = ssub.s32 %s29, 2
      %s42 = sadd.s32 1, %s37
      %p43 = scmp.ge.s32.totalorder %s42, 2
      %s44 = scalar_select %p43, 0, %s42
      %s45 = sadd.s32 1, %s36
      %s46 = scalar_select %p43, %s45, %s36
      %p47 = scmp.ge.s32.totalorder %s46, 2
      %s48 = scalar_select %p47, 0, %s46
      %s49 = ssub.s32 %s36, %s48
      %p50 = scmp.eq.s32.totalorder %s49, 0
      %s52 = sadd.s32 %s51, 1
      %s53 = scalar_select %p50, %s51, %s52
      %p56 = pneg %p50
      %p57 = scmp.eq.s32.totalorder %s29, 3
      %p58 = por %p56, %p57
      %p59 = scmp.ne.s32.totalorder %s51, %s54
      %p60 = scmp.eq.s32.totalorder %s29, 0
      %p61 = por %p59, %p60
      %p62 = scmp.ne.s32.totalorder %s51, %s54
      %p63 = scmp.eq.s32.totalorder %s34, 3
      %p64 = por %p62, %p63
      %p65 = scmp.ne.s32.totalorder %s54, %s55
      %p66 = scmp.eq.s32.totalorder %s34, 0
      %p67 = por %p65, %p66
      %p68 = scmp.ne.s32.totalorder %s54, %s55
      %p69 = scmp.eq.s32.totalorder %s35, 3
      %p70 = por %p68, %p69
      %p72 = scmp.ne.s32.totalorder %s55, %s71
      %p73 = scmp.eq.s32.totalorder %s35, 0
      %p74 = por %p72, %p73
      %s75 = ssub.s32 %s36, %s48
      %p76 = scmp.eq.s32.totalorder %s75, 0
      %s78 = sadd.s32 %s77, 1
      %s79 = scalar_select %p76, %s77, %s78
      %p82 = pneg %p76
      %p83 = scmp.eq.s32.totalorder %s29, 3
      %p84 = por %p82, %p83
      %p85 = scmp.ne.s32.totalorder %s77, %s80
      %p86 = scmp.eq.s32.totalorder %s29, 0
      %p87 = por %p85, %p86
      %p88 = scmp.ne.s32.totalorder %s77, %s80
      %p89 = scmp.eq.s32.totalorder %s34, 3
      %p90 = por %p88, %p89
      %p91 = scmp.ne.s32.totalorder %s80, %s81
      %p92 = scmp.eq.s32.totalorder %s34, 0
      %p93 = por %p91, %p92
      %p94 = scmp.ne.s32.totalorder %s80, %s81
      %p95 = scmp.eq.s32.totalorder %s35, 3
      %p96 = por %p94, %p95
      %p98 = scmp.ne.s32.totalorder %s81, %s97
      %p99 = scmp.eq.s32.totalorder %s35, 0
      %p100 = por %p98, %p99
      %s102 = sadd.s32 %s101, 1
      %p105 = scmp.eq.s32.totalorder %s29, 3
      %p106 = scmp.ne.s32.totalorder %s101, %s103
      %p107 = scmp.eq.s32.totalorder %s29, 0
      %p108 = por %p106, %p107
      %p109 = scmp.ne.s32.totalorder %s101, %s103
      %p110 = scmp.eq.s32.totalorder %s34, 3
      %p111 = por %p109, %p110
      %p112 = scmp.ne.s32.totalorder %s103, %s104
      %p113 = scmp.eq.s32.totalorder %s34, 0
      %p114 = por %p112, %p113
      %p115 = scmp.ne.s32.totalorder %s103, %s104
      %p116 = scmp.eq.s32.totalorder %s35, 3
      %p117 = por %p115, %p116
      %p119 = scmp.ne.s32.totalorder %s104, %s118
      %p120 = scmp.eq.s32.totalorder %s35, 0
      %p121 = por %p119, %p120
      %s123 = sadd.s32 %s122, 1
      %p126 = scmp.eq.s32.totalorder %s29, 3
      %p127 = scmp.ne.s32.totalorder %s122, %s124
      %p128 = scmp.eq.s32.totalorder %s29, 0
      %p129 = por %p127, %p128
      %p130 = scmp.ne.s32.totalorder %s122, %s124
      %p131 = scmp.eq.s32.totalorder %s34, 3
      %p132 = por %p130, %p131
      %p133 = scmp.ne.s32.totalorder %s124, %s125
      %p134 = scmp.eq.s32.totalorder %s34, 0
      %p135 = por %p133, %p134
      %p136 = scmp.ne.s32.totalorder %s124, %s125
      %p137 = scmp.eq.s32.totalorder %s35, 3
      %p138 = por %p136, %p137
      %p140 = scmp.ne.s32.totalorder %s125, %s139
      %p141 = scmp.eq.s32.totalorder %s35, 0
      %p142 = por %p140, %p141
      %s143 = ssub.s32 %s37, %s44
      %p144 = scmp.eq.s32.totalorder %s143, 0
      %s146 = sadd.s32 %s145, 1
      %s147 = scalar_select %p144, %s145, %s146
      %p150 = pneg %p144
      %p151 = scmp.eq.s32.totalorder %s29, 3
      %p152 = por %p150, %p151
      %p153 = scmp.ne.s32.totalorder %s145, %s148
      %p154 = scmp.eq.s32.totalorder %s29, 0
      %p155 = por %p153, %p154
      %p156 = scmp.ne.s32.totalorder %s145, %s148
      %p157 = scmp.eq.s32.totalorder %s34, 3
      %p158 = por %p156, %p157
      %p159 = scmp.ne.s32.totalorder %s148, %s149
      %p160 = scmp.eq.s32.totalorder %s34, 0
      %p161 = por %p159, %p160
      %p162 = scmp.ne.s32.totalorder %s148, %s149
      %p163 = scmp.eq.s32.totalorder %s35, 3
      %p164 = por %p162, %p163
      %p166 = scmp.ne.s32.totalorder %s149, %s165
      %p167 = scmp.eq.s32.totalorder %s35, 0
      %p168 = por %p166, %p167
      %s169 = ssub.s32 %s37, %s44
      %p170 = scmp.eq.s32.totalorder %s169, 0
      %s172 = sadd.s32 %s171, 1
      %s173 = scalar_select %p170, %s171, %s172
      %p176 = pneg %p170
      %p177 = scmp.eq.s32.totalorder %s29, 3
      %p178 = por %p176, %p177
      %p179 = scmp.ne.s32.totalorder %s171, %s174
      %p180 = scmp.eq.s32.totalorder %s29, 0
      %p181 = por %p179, %p180
      %p182 = scmp.ne.s32.totalorder %s171, %s174
      %p183 = scmp.eq.s32.totalorder %s34, 3
      %p184 = por %p182, %p183
      %p185 = scmp.ne.s32.totalorder %s174, %s175
      %p186 = scmp.eq.s32.totalorder %s34, 0
      %p187 = por %p185, %p186
      %p188 = scmp.ne.s32.totalorder %s174, %s175
      %p189 = scmp.eq.s32.totalorder %s35, 3
      %p190 = por %p188, %p189
      %p192 = scmp.ne.s32.totalorder %s175, %s191
      %p193 = scmp.eq.s32.totalorder %s35, 0
      %p194 = por %p192, %p193
      %s195 = ssub.s32 %s37, %s44
      %p196 = scmp.eq.s32.totalorder %s195, 0
      %s198 = sadd.s32 %s197, 1
      %s199 = scalar_select %p196, %s197, %s198
      %p202 = pneg %p196
      %p203 = scmp.eq.s32.totalorder %s29, 3
      %p204 = por %p202, %p203
      %p205 = scmp.ne.s32.totalorder %s197, %s200
      %p206 = scmp.eq.s32.totalorder %s29, 0
      %p207 = por %p205, %p206
      %p208 = scmp.ne.s32.totalorder %s197, %s200
      %p209 = scmp.eq.s32.totalorder %s34, 3
      %p210 = por %p208, %p209
      %p211 = scmp.ne.s32.totalorder %s200, %s201
      %p212 = scmp.eq.s32.totalorder %s34, 0
      %p213 = por %p211, %p212
      %p214 = scmp.ne.s32.totalorder %s200, %s201
      %p215 = scmp.eq.s32.totalorder %s35, 3
      %p216 = por %p214, %p215
      %p218 = scmp.ne.s32.totalorder %s201, %s217
      %p219 = scmp.eq.s32.totalorder %s35, 0
      %p220 = por %p218, %p219
      %s221 = ssub.s32 %s37, %s44
      %p222 = scmp.eq.s32.totalorder %s221, 0
      %s224 = sadd.s32 %s223, 1
      %s225 = scalar_select %p222, %s223, %s224
      %p228 = pneg %p222
      %p229 = scmp.eq.s32.totalorder %s29, 3
      %p230 = por %p228, %p229
      %p231 = scmp.ne.s32.totalorder %s223, %s226
      %p232 = scmp.eq.s32.totalorder %s29, 0
      %p233 = por %p231, %p232
      %p234 = scmp.ne.s32.totalorder %s223, %s226
      %p235 = scmp.eq.s32.totalorder %s34, 3
      %p236 = por %p234, %p235
      %p237 = scmp.ne.s32.totalorder %s226, %s227
      %p238 = scmp.eq.s32.totalorder %s34, 0
      %p239 = por %p237, %p238
      %p240 = scmp.ne.s32.totalorder %s226, %s227
      %p241 = scmp.eq.s32.totalorder %s35, 3
      %p242 = por %p240, %p241
      %p244 = scmp.ne.s32.totalorder %s227, %s243
      %p245 = scmp.eq.s32.totalorder %s35, 0
      %p246 = por %p244, %p245
      %s247 = ssub.s32 %s37, %s44
      %p248 = scmp.eq.s32.totalorder %s247, 0
      %s250 = sadd.s32 %s249, 1
      %s251 = scalar_select %p248, %s249, %s250
      %p254 = pneg %p248
      %p255 = scmp.eq.s32.totalorder %s29, 3
      %p256 = por %p254, %p255
      %p257 = scmp.ne.s32.totalorder %s249, %s252
      %p258 = scmp.eq.s32.totalorder %s29, 0
      %p259 = por %p257, %p258
      %p260 = scmp.ne.s32.totalorder %s249, %s252
      %p261 = scmp.eq.s32.totalorder %s34, 3
      %p262 = por %p260, %p261
      %p263 = scmp.ne.s32.totalorder %s252, %s253
      %p264 = scmp.eq.s32.totalorder %s34, 0
      %p265 = por %p263, %p264
      %p266 = scmp.ne.s32.totalorder %s252, %s253
      %p267 = scmp.eq.s32.totalorder %s35, 3
      %p268 = por %p266, %p267
      %p270 = scmp.ne.s32.totalorder %s253, %s269
      %p271 = scmp.eq.s32.totalorder %s35, 0
      %p272 = por %p270, %p271
      %s273 = ssub.s32 %s37, %s44
      %p274 = scmp.eq.s32.totalorder %s273, 0
      %s276 = sadd.s32 %s275, 1
      %s277 = scalar_select %p274, %s275, %s276
      %p280 = pneg %p274
      %p281 = scmp.eq.s32.totalorder %s29, 3
      %p282 = por %p280, %p281
      %p283 = scmp.ne.s32.totalorder %s275, %s278
      %p284 = scmp.eq.s32.totalorder %s29, 0
      %p285 = por %p283, %p284
      %p286 = scmp.ne.s32.totalorder %s275, %s278
      %p287 = scmp.eq.s32.totalorder %s34, 3
      %p288 = por %p286, %p287
      %p289 = scmp.ne.s32.totalorder %s278, %s279
      %p290 = scmp.eq.s32.totalorder %s34, 0
      %p291 = por %p289, %p290
      %p292 = scmp.ne.s32.totalorder %s278, %s279
      %p293 = scmp.eq.s32.totalorder %s35, 3
      %p294 = por %p292, %p293
      %p296 = scmp.ne.s32.totalorder %s279, %s295
      %p297 = scmp.eq.s32.totalorder %s35, 0
      %p298 = por %p296, %p297
      %s299 = ssub.s32 %s37, %s44
      %p300 = scmp.eq.s32.totalorder %s299, 0
      %s302 = sadd.s32 %s301, 1
      %s303 = scalar_select %p300, %s301, %s302
      %p306 = pneg %p300
      %p307 = scmp.eq.s32.totalorder %s29, 3
      %p308 = por %p306, %p307
      %p309 = scmp.ne.s32.totalorder %s301, %s304
      %p310 = scmp.eq.s32.totalorder %s29, 0
      %p311 = por %p309, %p310
      %p312 = scmp.ne.s32.totalorder %s301, %s304
      %p313 = scmp.eq.s32.totalorder %s34, 3
      %p314 = por %p312, %p313
      %p315 = scmp.ne.s32.totalorder %s304, %s305
      %p316 = scmp.eq.s32.totalorder %s34, 0
      %p317 = por %p315, %p316
      %p318 = scmp.ne.s32.totalorder %s304, %s305
      %p319 = scmp.eq.s32.totalorder %s35, 3
      %p320 = por %p318, %p319
      %p322 = scmp.ne.s32.totalorder %s305, %s321
      %p323 = scmp.eq.s32.totalorder %s35, 0
      %p324 = por %p322, %p323
      %s325 = ssub.s32 %s37, %s44
      %p326 = scmp.eq.s32.totalorder %s325, 0
      %s328 = sadd.s32 %s327, 1
      %s329 = scalar_select %p326, %s327, %s328
      %p332 = pneg %p326
      %p333 = scmp.eq.s32.totalorder %s29, 3
      %p334 = por %p332, %p333
      %p335 = scmp.ne.s32.totalorder %s327, %s330
      %p336 = scmp.eq.s32.totalorder %s29, 0
      %p337 = por %p335, %p336
      %p338 = scmp.ne.s32.totalorder %s327, %s330
      %p339 = scmp.eq.s32.totalorder %s34, 3
      %p340 = por %p338, %p339
      %p341 = scmp.ne.s32.totalorder %s330, %s331
      %p342 = scmp.eq.s32.totalorder %s34, 0
      %p343 = por %p341, %p342
      %p344 = scmp.ne.s32.totalorder %s330, %s331
      %p345 = scmp.eq.s32.totalorder %s35, 3
      %p346 = por %p344, %p345
      %p348 = scmp.ne.s32.totalorder %s331, %s347
      %p349 = scmp.eq.s32.totalorder %s35, 0
      %p350 = por %p348, %p349
      %s351 = ssub.s32 %s37, %s44
      %p352 = scmp.eq.s32.totalorder %s351, 0
      %s354 = sadd.s32 %s353, 1
      %s355 = scalar_select %p352, %s353, %s354
      %p358 = pneg %p352
      %p359 = scmp.eq.s32.totalorder %s29, 3
      %p360 = por %p358, %p359
      %p361 = scmp.ne.s32.totalorder %s353, %s356
      %p362 = scmp.eq.s32.totalorder %s29, 0
      %p363 = por %p361, %p362
      %p364 = scmp.ne.s32.totalorder %s353, %s356
      %p365 = scmp.eq.s32.totalorder %s34, 3
      %p366 = por %p364, %p365
      %p367 = scmp.ne.s32.totalorder %s356, %s357
      %p368 = scmp.eq.s32.totalorder %s34, 0
      %p369 = por %p367, %p368
      %p370 = scmp.ne.s32.totalorder %s356, %s357
      %p371 = scmp.eq.s32.totalorder %s35, 3
      %p372 = por %p370, %p371
      %p374 = scmp.ne.s32.totalorder %s357, %s373
      %p375 = scmp.eq.s32.totalorder %s35, 0
      %p376 = por %p374, %p375
      %s377 = ssub.s32 %s37, %s44
      %p378 = scmp.eq.s32.totalorder %s377, 0
      %s380 = sadd.s32 %s379, 1
      %s381 = scalar_select %p378, %s379, %s380
      %p384 = pneg %p378
      %p385 = scmp.eq.s32.totalorder %s29, 3
      %p386 = por %p384, %p385
      %p387 = scmp.ne.s32.totalorder %s379, %s382
      %p388 = scmp.eq.s32.totalorder %s29, 0
      %p389 = por %p387, %p388
      %p390 = scmp.ne.s32.totalorder %s379, %s382
      %p391 = scmp.eq.s32.totalorder %s34, 3
      %p392 = por %p390, %p391
      %p393 = scmp.ne.s32.totalorder %s382, %s383
      %p394 = scmp.eq.s32.totalorder %s34, 0
      %p395 = por %p393, %p394
      %p396 = scmp.ne.s32.totalorder %s382, %s383
      %p397 = scmp.eq.s32.totalorder %s35, 3
      %p398 = por %p396, %p397
      %p400 = scmp.ne.s32.totalorder %s383, %s399
      %p401 = scmp.eq.s32.totalorder %s35, 0
      %p402 = por %p400, %p401
      %s403 = ssub.s32 %s37, %s44
      %p404 = scmp.eq.s32.totalorder %s403, 0
      %s406 = sadd.s32 %s405, 1
      %s407 = scalar_select %p404, %s405, %s406
      %p410 = pneg %p404
      %p411 = scmp.eq.s32.totalorder %s29, 3
      %p412 = por %p410, %p411
      %p413 = scmp.ne.s32.totalorder %s405, %s408
      %p414 = scmp.eq.s32.totalorder %s29, 0
      %p415 = por %p413, %p414
      %p416 = scmp.ne.s32.totalorder %s405, %s408
      %p417 = scmp.eq.s32.totalorder %s34, 3
      %p418 = por %p416, %p417
      %p419 = scmp.ne.s32.totalorder %s408, %s409
      %p420 = scmp.eq.s32.totalorder %s34, 0
      %p421 = por %p419, %p420
      %p422 = scmp.ne.s32.totalorder %s408, %s409
      %p423 = scmp.eq.s32.totalorder %s35, 3
      %p424 = por %p422, %p423
      %p426 = scmp.ne.s32.totalorder %s409, %s425
      %p427 = scmp.eq.s32.totalorder %s35, 0
      %p428 = por %p426, %p427
      %s429 = ssub.s32 %s37, %s44
      %p430 = scmp.eq.s32.totalorder %s429, 0
      %s432 = sadd.s32 %s431, 1
      %s433 = scalar_select %p430, %s431, %s432
      %p436 = pneg %p430
      %p437 = scmp.eq.s32.totalorder %s29, 3
      %p438 = por %p436, %p437
      %p439 = scmp.ne.s32.totalorder %s431, %s434
      %p440 = scmp.eq.s32.totalorder %s29, 0
      %p441 = por %p439, %p440
      %p442 = scmp.ne.s32.totalorder %s431, %s434
      %p443 = scmp.eq.s32.totalorder %s34, 3
      %p444 = por %p442, %p443
      %p445 = scmp.ne.s32.totalorder %s434, %s435
      %p446 = scmp.eq.s32.totalorder %s34, 0
      %p447 = por %p445, %p446
      %p448 = scmp.ne.s32.totalorder %s434, %s435
      %p449 = scmp.eq.s32.totalorder %s35, 3
      %p450 = por %p448, %p449
      %p452 = scmp.ne.s32.totalorder %s435, %s451
      %p453 = scmp.eq.s32.totalorder %s35, 0
      %p454 = por %p452, %p453
      %s456 = sadd.s32 %s455, 1
      %p459 = scmp.eq.s32.totalorder %s29, 3
      %p460 = scmp.ne.s32.totalorder %s455, %s457
      %p461 = scmp.eq.s32.totalorder %s29, 0
      %p462 = por %p460, %p461
      %p463 = scmp.ne.s32.totalorder %s455, %s457
      %p464 = scmp.eq.s32.totalorder %s34, 3
      %p465 = por %p463, %p464
      %p466 = scmp.ne.s32.totalorder %s457, %s458
      %p467 = scmp.eq.s32.totalorder %s34, 0
      %p468 = por %p466, %p467
      %p469 = scmp.ne.s32.totalorder %s457, %s458
      %p470 = scmp.eq.s32.totalorder %s35, 3
      %p471 = por %p469, %p470
      %p473 = scmp.ne.s32.totalorder %s458, %s472
      %p474 = scmp.eq.s32.totalorder %s35, 0
      %p475 = por %p473, %p474
      %s477 = sadd.s32 %s476, 1
      %p480 = scmp.eq.s32.totalorder %s29, 3
      %p481 = scmp.ne.s32.totalorder %s476, %s478
      %p482 = scmp.eq.s32.totalorder %s29, 0
      %p483 = por %p481, %p482
      %p484 = scmp.ne.s32.totalorder %s476, %s478
      %p485 = scmp.eq.s32.totalorder %s34, 3
      %p486 = por %p484, %p485
      %p487 = scmp.ne.s32.totalorder %s478, %s479
      %p488 = scmp.eq.s32.totalorder %s34, 0
      %p489 = por %p487, %p488
      %p490 = scmp.ne.s32.totalorder %s478, %s479
      %p491 = scmp.eq.s32.totalorder %s35, 3
      %p492 = por %p490, %p491
      %p494 = scmp.ne.s32.totalorder %s479, %s493
      %p495 = scmp.eq.s32.totalorder %s35, 0
      %p496 = por %p494, %p495
      %s498 = sadd.s32 %s497, 1
      %p501 = scmp.eq.s32.totalorder %s29, 3
      %p502 = scmp.ne.s32.totalorder %s497, %s499
      %p503 = scmp.eq.s32.totalorder %s29, 0
      %p504 = por %p502, %p503
      %p505 = scmp.ne.s32.totalorder %s497, %s499
      %p506 = scmp.eq.s32.totalorder %s34, 3
      %p507 = por %p505, %p506
      %p508 = scmp.ne.s32.totalorder %s499, %s500
      %p509 = scmp.eq.s32.totalorder %s34, 0
      %p510 = por %p508, %p509
      %p511 = scmp.ne.s32.totalorder %s499, %s500
      %p512 = scmp.eq.s32.totalorder %s35, 3
      %p513 = por %p511, %p512
      %p515 = scmp.ne.s32.totalorder %s500, %s514
      %p516 = scmp.eq.s32.totalorder %s35, 0
      %p517 = por %p515, %p516
      %s519 = sadd.s32 %s518, 1
      %p522 = scmp.eq.s32.totalorder %s29, 3
      %p523 = scmp.ne.s32.totalorder %s518, %s520
      %p524 = scmp.eq.s32.totalorder %s29, 0
      %p525 = por %p523, %p524
      %p526 = scmp.ne.s32.totalorder %s518, %s520
      %p527 = scmp.eq.s32.totalorder %s34, 3
      %p528 = por %p526, %p527
      %p529 = scmp.ne.s32.totalorder %s520, %s521
      %p530 = scmp.eq.s32.totalorder %s34, 0
      %p531 = por %p529, %p530
      %p532 = scmp.ne.s32.totalorder %s520, %s521
      %p533 = scmp.eq.s32.totalorder %s35, 3
      %p534 = por %p532, %p533
      %p536 = scmp.ne.s32.totalorder %s521, %s535
      %p537 = scmp.eq.s32.totalorder %s35, 0
      %p538 = por %p536, %p537
      %s539 = ssub.s32 %s36, %s48
      %p540 = scmp.eq.s32.totalorder %s539, 0
      %s542 = sadd.s32 %s541, 1
      %s543 = scalar_select %p540, %s541, %s542
      %p546 = pneg %p540
      %p547 = scmp.eq.s32.totalorder %s29, 3
      %p548 = por %p546, %p547
      %p549 = scmp.ne.s32.totalorder %s541, %s544
      %p550 = scmp.eq.s32.totalorder %s29, 0
      %p551 = por %p549, %p550
      %p552 = scmp.ne.s32.totalorder %s541, %s544
      %p553 = scmp.eq.s32.totalorder %s34, 3
      %p554 = por %p552, %p553
      %p555 = scmp.ne.s32.totalorder %s544, %s545
      %p556 = scmp.eq.s32.totalorder %s34, 0
      %p557 = por %p555, %p556
      %p558 = scmp.ne.s32.totalorder %s544, %s545
      %p559 = scmp.eq.s32.totalorder %s35, 3
      %p560 = por %p558, %p559
      %p562 = scmp.ne.s32.totalorder %s545, %s561
      %p563 = scmp.eq.s32.totalorder %s35, 0
      %p564 = por %p562, %p563
      %p565 = scmp.le.s32.totalorder 1, %s29
      %p566 = scmp.lt.s32.totalorder %s29, 5
      %p567 = pnand %p565, %p566
      %p568 = pneg %p567
      // Predicated region
      $region9: #{tpu_custom_call.1} parent=5 // pred_check
        _
      $region10: #{tpu_custom_call.1} parent=5 // pred_check_branch
        %570 = sbr.rel (%p567) target = $region12
      $region11: #{tpu_custom_call.1} parent=5 // pred_region
        %s571 = ssub.s32 %s29, 1
        // Predicated region
        $region13: #{tpu_custom_call.1} parent=11 // pred_check
          %p572 = pneg %p114
        $region14: #{tpu_custom_call.1} parent=11 // pred_check_branch
          %574 = sbr.rel (%p572) target = $region16
        $region15: #{tpu_custom_call.1} parent=11 // pred_region
          _
        $region16: #{tpu_custom_call.1} parent=11 // pred_fallthru
          _
        // Predicated region
        $region17: #{tpu_custom_call.1} parent=11 // pred_check
          %p575 = pneg %p135
        $region18: #{tpu_custom_call.1} parent=11 // pred_check_branch
          %577 = sbr.rel (%p575) target = $region20
        $region19: #{tpu_custom_call.1} parent=11 // pred_region
          _
        $region20: #{tpu_custom_call.1} parent=11 // pred_fallthru
          _
        // Predicated region
        $region21: #{tpu_custom_call.1} parent=11 // pred_check
          %p578 = pneg %p468
        $region22: #{tpu_custom_call.1} parent=11 // pred_check_branch
          %580 = sbr.rel (%p578) target = $region24
        $region23: #{tpu_custom_call.1} parent=11 // pred_region
          _
        $region24: #{tpu_custom_call.1} parent=11 // pred_fallthru
          _
        // Predicated region
        $region25: #{tpu_custom_call.1} parent=11 // pred_check
          %p581 = pneg %p489
        $region26: #{tpu_custom_call.1} parent=11 // pred_check_branch
          %583 = sbr.rel (%p581) target = $region28
        $region27: #{tpu_custom_call.1} parent=11 // pred_region
          _
        $region28: #{tpu_custom_call.1} parent=11 // pred_fallthru
          _
        // Predicated region
        $region29: #{tpu_custom_call.1} parent=11 // pred_check
          %p584 = pneg %p510
        $region30: #{tpu_custom_call.1} parent=11 // pred_check_branch
          %586 = sbr.rel (%p584) target = $region32
        $region31: #{tpu_custom_call.1} parent=11 // pred_region
          _
        $region32: #{tpu_custom_call.1} parent=11 // pred_fallthru
          _
        // Predicated region
        $region33: #{tpu_custom_call.1} parent=11 // pred_check
          %p587 = pneg %p531
        $region34: #{tpu_custom_call.1} parent=11 // pred_check_branch
          %589 = sbr.rel (%p587) target = $region36
        $region35: #{tpu_custom_call.1} parent=11 // pred_region
          _
        $region36: #{tpu_custom_call.1} parent=11 // pred_fallthru
          _
      $region12: #{tpu_custom_call.1} parent=5 // pred_fallthru
        _
      %p590 = scmp.lt.s32.totalorder %s29, 4
      // Predicated region
      $region37: #{tpu_custom_call.1} parent=5 // pred_check
        %p591 = pneg %p590
      $region38: #{tpu_custom_call.1} parent=5 // pred_check_branch
        %593 = sbr.rel (%p591) target = $region40
      $region39: #{tpu_custom_call.1} parent=5 // pred_region
        // Predicated region
        $region41: #{tpu_custom_call.1} parent=39 // pred_check
          %p594 = pneg %p61
        $region42: #{tpu_custom_call.1} parent=39 // pred_check_branch
          %596 = sbr.rel (%p594) target = $region44
        $region43: #{tpu_custom_call.1} parent=39 // pred_region
          %p597 = scmp.lt.s32.totalorder %s36, 1
          %s598 = scalar_select %p597, %s36, 1
          %s599 = smul.addr %s598, 8
          %s600 = scalar_lea.vmem %s0, %s599
        $region44: #{tpu_custom_call.1} parent=39 // pred_fallthru
          _
        // Predicated region
        $region45: #{tpu_custom_call.1} parent=39 // pred_check
          %p601 = pneg %p87
        $region46: #{tpu_custom_call.1} parent=39 // pred_check_branch
          %603 = sbr.rel (%p601) target = $region48
        $region47: #{tpu_custom_call.1} parent=39 // pred_region
          %p604 = scmp.lt.s32.totalorder %s36, 1
          %s605 = scalar_select %p604, %s36, 1
          %s606 = scalar_lea.vmem %s1, %s605
        $region48: #{tpu_custom_call.1} parent=39 // pred_fallthru
          _
        // Predicated region
        $region49: #{tpu_custom_call.1} parent=39 // pred_check
          %p607 = pneg %p155
        $region50: #{tpu_custom_call.1} parent=39 // pred_check_branch
          %609 = sbr.rel (%p607) target = $region52
        $region51: #{tpu_custom_call.1} parent=39 // pred_region
          %p610 = scmp.lt.s32.totalorder %s37, 1
          %s611 = scalar_select %p610, %s37, 1
          %s612 = smul.addr %s611, 4
          %s613 = smul.addr %s612, 4
          %s614 = scalar_lea.vmem %s4, %s613
        $region52: #{tpu_custom_call.1} parent=39 // pred_fallthru
          _
        // Predicated region
        $region53: #{tpu_custom_call.1} parent=39 // pred_check
          %p615 = pneg %p181
        $region54: #{tpu_custom_call.1} parent=39 // pred_check_branch
          %617 = sbr.rel (%p615) target = $region56
        $region55: #{tpu_custom_call.1} parent=39 // pred_region
          %p618 = scmp.lt.s32.totalorder %s37, 1
          %s619 = scalar_select %p618, %s37, 1
          %s620 = scalar_lea.vmem %s5, %s619
        $region56: #{tpu_custom_call.1} parent=39 // pred_fallthru
          _
        // Predicated region
        $region57: #{tpu_custom_call.1} parent=39 // pred_check
          %p621 = pneg %p207
        $region58: #{tpu_custom_call.1} parent=39 // pred_check_branch
          %623 = sbr.rel (%p621) target = $region60
        $region59: #{tpu_custom_call.1} parent=39 // pred_region
          %p624 = scmp.lt.s32.totalorder %s37, 1
          %s625 = scalar_select %p624, %s37, 1
          %s626 = smul.addr %s625, 4
          %s627 = smul.addr %s626, 4
          %s628 = scalar_lea.vmem %s6, %s627
        $region60: #{tpu_custom_call.1} parent=39 // pred_fallthru
          _
        // Predicated region
        $region61: #{tpu_custom_call.1} parent=39 // pred_check
          %p629 = pneg %p233
        $region62: #{tpu_custom_call.1} parent=39 // pred_check_branch
          %631 = sbr.rel (%p629) target = $region64
        $region63: #{tpu_custom_call.1} parent=39 // pred_region
          %p632 = scmp.lt.s32.totalorder %s37, 1
          %s633 = scalar_select %p632, %s37, 1
          %s634 = scalar_lea.vmem %s7, %s633
        $region64: #{tpu_custom_call.1} parent=39 // pred_fallthru
          _
        // Predicated region
        $region65: #{tpu_custom_call.1} parent=39 // pred_check
          %p635 = pneg %p259
        $region66: #{tpu_custom_call.1} parent=39 // pred_check_branch
          %637 = sbr.rel (%p635) target = $region68
        $region67: #{tpu_custom_call.1} parent=39 // pred_region
          %p638 = scmp.lt.s32.totalorder %s37, 1
          %s639 = scalar_select %p638, %s37, 1
          %s640 = scalar_lea.vmem %s8, %s639
        $region68: #{tpu_custom_call.1} parent=39 // pred_fallthru
          _
        // Predicated region
        $region69: #{tpu_custom_call.1} parent=39 // pred_check
          %p641 = pneg %p285
        $region70: #{tpu_custom_call.1} parent=39 // pred_check_branch
          %643 = sbr.rel (%p641) target = $region72
        $region71: #{tpu_custom_call.1} parent=39 // pred_region
          %p644 = scmp.lt.s32.totalorder %s37, 1
          %s645 = scalar_select %p644, %s37, 1
          %s646 = scalar_lea.vmem %s9, %s645
        $region72: #{tpu_custom_call.1} parent=39 // pred_fallthru
          _
        // Predicated region
        $region73: #{tpu_custom_call.1} parent=39 // pred_check
          %p647 = pneg %p311
        $region74: #{tpu_custom_call.1} parent=39 // pred_check_branch
          %649 = sbr.rel (%p647) target = $region76
        $region75: #{tpu_custom_call.1} parent=39 // pred_region
          %p650 = scmp.lt.s32.totalorder %s37, 1
          %s651 = scalar_select %p650, %s37, 1
          %s652 = smul.addr %s651, 4
          %s653 = smul.addr %s652, 4
          %s654 = scalar_lea.vmem %s10, %s653
        $region76: #{tpu_custom_call.1} parent=39 // pred_fallthru
          _
        // Predicated region
        $region77: #{tpu_custom_call.1} parent=39 // pred_check
          %p655 = pneg %p337
        $region78: #{tpu_custom_call.1} parent=39 // pred_check_branch
          %657 = sbr.rel (%p655) target = $region80
        $region79: #{tpu_custom_call.1} parent=39 // pred_region
          %p658 = scmp.lt.s32.totalorder %s37, 1
          %s659 = scalar_select %p658, %s37, 1
          %s660 = scalar_lea.vmem %s11, %s659
        $region80: #{tpu_custom_call.1} parent=39 // pred_fallthru
          _
        // Predicated region
        $region81: #{tpu_custom_call.1} parent=39 // pred_check
          %p661 = pneg %p363
        $region82: #{tpu_custom_call.1} parent=39 // pred_check_branch
          %663 = sbr.rel (%p661) target = $region84
        $region83: #{tpu_custom_call.1} parent=39 // pred_region
          %p664 = scmp.lt.s32.totalorder %s37, 1
          %s665 = scalar_select %p664, %s37, 1
          %s666 = smul.addr %s665, 16
          %s667 = smul.addr %s666, 4
          %s668 = scalar_lea.vmem %s12, %s667
        $region84: #{tpu_custom_call.1} parent=39 // pred_fallthru
          _
        // Predicated region
        $region85: #{tpu_custom_call.1} parent=39 // pred_check
          %p669 = pneg %p389
        $region86: #{tpu_custom_call.1} parent=39 // pred_check_branch
          %671 = sbr.rel (%p669) target = $region88
        $region87: #{tpu_custom_call.1} parent=39 // pred_region
          %p672 = scmp.lt.s32.totalorder %s37, 1
          %s673 = scalar_select %p672, %s37, 1
          %s674 = scalar_lea.vmem %s13, %s673
        $region88: #{tpu_custom_call.1} parent=39 // pred_fallthru
          _
        // Predicated region
        $region89: #{tpu_custom_call.1} parent=39 // pred_check
          %p675 = pneg %p415
        $region90: #{tpu_custom_call.1} parent=39 // pred_check_branch
          %677 = sbr.rel (%p675) target = $region92
        $region91: #{tpu_custom_call.1} parent=39 // pred_region
          %p678 = scmp.lt.s32.totalorder %s37, 1
          %s679 = scalar_select %p678, %s37, 1
          %s680 = scalar_lea.vmem %s14, %s679
        $region92: #{tpu_custom_call.1} parent=39 // pred_fallthru
          _
        // Predicated region
        $region93: #{tpu_custom_call.1} parent=39 // pred_check
          %p681 = pneg %p441
        $region94: #{tpu_custom_call.1} parent=39 // pred_check_branch
          %683 = sbr.rel (%p681) target = $region96
        $region95: #{tpu_custom_call.1} parent=39 // pred_region
          %p684 = scmp.lt.s32.totalorder %s37, 1
          %s685 = scalar_select %p684, %s37, 1
          %s686 = scalar_lea.vmem %s15, %s685
        $region96: #{tpu_custom_call.1} parent=39 // pred_fallthru
          _
      $region40: #{tpu_custom_call.1} parent=5 // pred_fallthru
        _
      %p687 = scmp.le.s32.totalorder 1, %s29
      %p688 = scmp.lt.s32.totalorder %s29, 5
      %p689 = pnand %p687, %p688
      %p690 = pneg %p689
      // Predicated region
      $region97: #{tpu_custom_call.1} parent=5 // pred_check
        _
      $region98: #{tpu_custom_call.1} parent=5 // pred_check_branch
        %692 = sbr.rel (%p689) target = $region100
      $region99: #{tpu_custom_call.1} parent=5 // pred_region
        %s693 = ssub.s32 %s29, 1
        %p694 = scmp.lt.s32.totalorder %s38, 1
        %s695 = scalar_select %p694, %s38, 1
        %s696 = smul.addr %s695, 8
        %s697 = scalar_lea.vmem %s0, %s696
        %p698 = pneg %p67
        %p699 = pneg %p64
        %p700 = scmp.lt.s32.totalorder %s38, 1
        %s701 = scalar_select %p700, %s38, 1
        %s702 = scalar_lea.vmem %s1, %s701
        %p703 = pneg %p93
        %p704 = pneg %p90
        %p705 = pneg %p114
        %p706 = pneg %p111
        %p707 = pneg %p135
        %p708 = pneg %p132
        %p709 = scmp.lt.s32.totalorder %s39, 1
        %s710 = scalar_select %p709, %s39, 1
        %s711 = smul.addr %s710, 4
        %s712 = smul.addr %s711, 4
        %s713 = scalar_lea.vmem %s4, %s712
        %p714 = pneg %p161
        %p715 = pneg %p158
        %p716 = scmp.lt.s32.totalorder %s39, 1
        %s717 = scalar_select %p716, %s39, 1
        %s718 = scalar_lea.vmem %s5, %s717
        %p719 = pneg %p187
        %p720 = pneg %p184
        %p721 = scmp.lt.s32.totalorder %s39, 1
        %s722 = scalar_select %p721, %s39, 1
        %s723 = smul.addr %s722, 4
        %s724 = smul.addr %s723, 4
        %s725 = scalar_lea.vmem %s6, %s724
        %p726 = pneg %p213
        %p727 = pneg %p210
        %p728 = scmp.lt.s32.totalorder %s39, 1
        %s729 = scalar_select %p728, %s39, 1
        %s730 = scalar_lea.vmem %s7, %s729
        %p731 = pneg %p239
        %p732 = pneg %p236
        %p733 = scmp.lt.s32.totalorder %s39, 1
        %s734 = scalar_select %p733, %s39, 1
        %s735 = scalar_lea.vmem %s8, %s734
        %p736 = pneg %p265
        %p737 = pneg %p262
        %p738 = scmp.lt.s32.totalorder %s39, 1
        %s739 = scalar_select %p738, %s39, 1
        %s740 = scalar_lea.vmem %s9, %s739
        %p741 = pneg %p291
        %p742 = pneg %p288
        %p743 = scmp.lt.s32.totalorder %s39, 1
        %s744 = scalar_select %p743, %s39, 1
        %s745 = smul.addr %s744, 4
        %s746 = smul.addr %s745, 4
        %s747 = scalar_lea.vmem %s10, %s746
        %p748 = pneg %p317
        %p749 = pneg %p314
        %p750 = scmp.lt.s32.totalorder %s39, 1
        %s751 = scalar_select %p750, %s39, 1
        %s752 = scalar_lea.vmem %s11, %s751
        %p753 = pneg %p343
        %p754 = pneg %p340
        %p755 = scmp.lt.s32.totalorder %s39, 1
        %s756 = scalar_select %p755, %s39, 1
        %s757 = smul.addr %s756, 16
        %s758 = smul.addr %s757, 4
        %s759 = scalar_lea.vmem %s12, %s758
        %p760 = pneg %p369
        %p761 = pneg %p366
        %p762 = scmp.lt.s32.totalorder %s39, 1
        %s763 = scalar_select %p762, %s39, 1
        %s764 = scalar_lea.vmem %s13, %s763
        %p765 = pneg %p395
        %p766 = pneg %p392
        %p767 = scmp.lt.s32.totalorder %s39, 1
        %s768 = scalar_select %p767, %s39, 1
        %s769 = scalar_lea.vmem %s14, %s768
        %p770 = pneg %p421
        %p771 = pneg %p418
        %p772 = scmp.lt.s32.totalorder %s39, 1
        %s773 = scalar_select %p772, %s39, 1
        %s774 = scalar_lea.vmem %s15, %s773
        %p775 = pneg %p447
        %p776 = pneg %p444
        %p777 = pneg %p468
        %p778 = pneg %p465
        %p779 = pneg %p489
        %p780 = pneg %p486
        %p781 = pneg %p510
        %p782 = pneg %p507
        %p783 = pneg %p531
        %p784 = pneg %p528
        %p785 = pneg %p557
        %p786 = pneg %p554
        %s787 = sand.u32 %s544, 1
        %s788 = scalar_lea.sflag [#allocation4], %s787
        %s789 = sand.u32 %s544, 1
        %s790 = smul.addr %s789, 8
        %s791 = scalar_lea.vmem [#allocation3], %s790
        %p792 = scmp.lt.s32.totalorder %s38, 1
        %s793 = scalar_select %p792, %s38, 1
        %s794 = smul.addr %s793, 8
        %s795 = scalar_lea.vmem %s0, %s794
        %p796 = scmp.lt.s32.totalorder %s38, 1
        %s797 = scalar_select %p796, %s38, 1
        %s798 = scalar_lea.vmem %s1, %s797
        %p799 = scmp.lt.s32.totalorder %s39, 1
        %s800 = scalar_select %p799, %s39, 1
        %s801 = smul.addr %s800, 4
        %s802 = smul.addr %s801, 4
        %s803 = scalar_lea.vmem %s4, %s802
        %p804 = scmp.lt.s32.totalorder %s39, 1
        %s805 = scalar_select %p804, %s39, 1
        %s806 = scalar_lea.vmem %s5, %s805
        %p807 = scmp.lt.s32.totalorder %s39, 1
        %s808 = scalar_select %p807, %s39, 1
        %s809 = smul.addr %s808, 4
        %s810 = smul.addr %s809, 4
        %s811 = scalar_lea.vmem %s6, %s810
        %p812 = scmp.lt.s32.totalorder %s39, 1
        %s813 = scalar_select %p812, %s39, 1
        %s814 = scalar_lea.vmem %s7, %s813
        %p815 = scmp.lt.s32.totalorder %s39, 1
        %s816 = scalar_select %p815, %s39, 1
        %s817 = scalar_lea.vmem %s8, %s816
        %p818 = scmp.lt.s32.totalorder %s39, 1
        %s819 = scalar_select %p818, %s39, 1
        %s820 = scalar_lea.vmem %s9, %s819
        %p821 = scmp.lt.s32.totalorder %s39, 1
        %s822 = scalar_select %p821, %s39, 1
        %s823 = smul.addr %s822, 4
        %s824 = smul.addr %s823, 4
        %s825 = scalar_lea.vmem %s10, %s824
        %p826 = scmp.lt.s32.totalorder %s39, 1
        %s827 = scalar_select %p826, %s39, 1
        %s828 = scalar_lea.vmem %s11, %s827
        %p829 = scmp.lt.s32.totalorder %s39, 1
        %s830 = scalar_select %p829, %s39, 1
        %s831 = smul.addr %s830, 16
        %s832 = smul.addr %s831, 4
        %s833 = scalar_lea.vmem %s12, %s832
        %p834 = scmp.lt.s32.totalorder %s39, 1
        %s835 = scalar_select %p834, %s39, 1
        %s836 = scalar_lea.vmem %s13, %s835
        %p837 = scmp.lt.s32.totalorder %s39, 1
        %s838 = scalar_select %p837, %s39, 1
        %s839 = scalar_lea.vmem %s14, %s838
        %p840 = scmp.lt.s32.totalorder %s39, 1
        %s841 = scalar_select %p840, %s39, 1
        %s842 = scalar_lea.vmem %s15, %s841
        %p844 = scmp.eq.s32.totalorder %s39, 0
        // Predicated region
        $region101: #{tpu_custom_call.1} parent=99 // pred_check
          %p845 = pneg %p844
        $region102: #{tpu_custom_call.1} parent=99 // pred_check_branch
          %847 = sbr.rel (%p845) target = $region104
        $region103: #{tpu_custom_call.1} parent=99 // pred_region
          %v848 = vld [vmem:[%s795] sm:$0xff]
          %v849 = vld [vmem:[%s2] sm:$0x1]
          %v850 = vld [vmem:[%s3] sm:$0x1]
          %vm851 = vcmask 261120
          %v852 = vsel %vm851, %v848, 0.0
          %853 = vadd.xlane.f32.xlu0 %v852
          %v854 = vpop.xlane.xlu0 %853
          %v855 = vrcp.pop 32.0
          %v856 = vmul.f32 %v854, %v855
          %v857 = vsub.f32 %v848, %v856
          %v858 = vmul.f32 %v857, %v857
          %v859 = vsel %vm851, %v858, 0.0
          %860 = vadd.xlane.f32.xlu0 %v859
          %v861 = vpop.xlane.xlu0 %860
          %v862 = vmul.f32 %v861, %v855
          %v863 = vadd.f32 %v862, 1e-05
          %v864 = vrsqrt.pop %v863
          %v865 = vmul.f32 %v857, %v864
          %v867 = vlaneseq
          %v868 = vshrl.u32 %v867, 7
          %v869 = vsub.s32 0, %v868
          %v870 = vrot.slane %v849, %v869
          %v872 = vmul.f32 %v865, %v870
          %v874 = vlaneseq
          %v875 = vshrl.u32 %v874, 7
          %v876 = vsub.s32 0, %v875
          %v877 = vrot.slane %v850, %v876
          %v879 = vadd.f32 %v872, %v877
          %880 = vst.msk [vmem:[#allocation2] sm:$0xff] %vm851, %v879
        $region104: #{tpu_custom_call.1} parent=99 // pred_fallthru
          _
        %v881 = vld [vmem:[#allocation2] sm:$0xff]
        %v882 = vpack.c.bf16 %v881, %v881
        %v883 = vld [vmem:[%s803] sm:$0xf]
        %v884 = vld [vmem:[%s803 + $0x4] sm:$0xf]
        %v885 = vld [vmem:[%s803 + $0x8] sm:$0xf]
        %v886 = vld [vmem:[%s803 + $0xc] sm:$0xf]
        %v887 = vld [vmem:[%s806] sm:$0x1]
        %v889 = vlaneseq
        %v890 = vshrl.u32 %v889, 7
        %v891 = vsub.s32 0, %v890
        %v892 = vrot.slane %v887, %v891
        %v898 = vunpack.c.l.b16 %v883
        %v899 = vunpack.c.l.b16 %v884
        %v900 = vunpack.c.l.b16 %v885
        %v901 = vunpack.c.l.b16 %v886
        %v902 = vpack.c.b16 %v899, %v898
        %v903 = vpack.c.b16 %v901, %v900
        %vm906 = vcmask 261120
        %v908 = vsel %vm906, %v882, 0
        %910 = vmatprep.subr.bf16.mxu0 0
        %911 = vmatpush1.bf16.msra.mxu0 0
        %912 = vmatprep.subr.bf16.mxu0 0
        %913 = vmatpush1.bf16.msra.mxu0 0
        %914 = vmatprep.subr.bf16.mxu0 0
        %915 = vmatpush1.bf16.msra.mxu0 0
        %916 = vmatprep.subr.bf16.mxu0 0
        %917 = vmatpush1.bf16.msra.mxu0 0
        %918 = vmatprep.subr.bf16.mxu0 0
        %919 = vmatpush1.bf16.msra.mxu0 0
        %920 = vmatprep.subr.bf16.mxu0 0
        %921 = vmatpush1.bf16.msra.mxu0 0
        %922 = vmatprep.subr.bf16.mxu0 0
        %923 = vmatpush1.bf16.msra.mxu0 %v903
        %924 = vmatprep.subr.bf16.mxu0 0
        %925 = vmatpush1.bf16.msra.mxu0 %v902
        %926 = vmatprep.subr.bf16.mxu0 0
        %927 = vmatpush2.bf16.msra.mxu0 0
        %928 = vmatprep.subr.bf16.mxu0 0
        %929 = vmatpush2.bf16.msra.mxu0 0
        %930 = vmatprep.subr.bf16.mxu0 0
        %931 = vmatpush2.bf16.msra.mxu0 0
        %932 = vmatprep.subr.bf16.mxu0 0
        %933 = vmatpush2.bf16.msra.mxu0 0
        %934 = vmatprep.subr.bf16.mxu0 0
        %935 = vmatpush2.bf16.msra.mxu0 0
        %936 = vmatprep.subr.bf16.mxu0 0
        %937 = vmatpush2.bf16.msra.mxu0 0
        %938 = vmatprep.subr.bf16.mxu0 0
        %939 = vmatpush2.bf16.msra.mxu0 0
        %940 = vmatprep.subr.bf16.mxu0 0
        %941 = vmatpush2.bf16.msra.mxu0 0
        %942 = vmatprep.mubr.bf16.mxu0 0
        %943 = vmatmul.mubr.bf16.gmra.mxu0 %v908
        %v944 = vpop.f32.mrf.mxu0
        %v945 = vadd.f32 %v892, %v944
        %v946 = vpop.f32.mrf.mxu0
        %v947 = vpop.f32.mrf.mxu0
        %v948 = vpop.f32.mrf.mxu0
        %949 = vdwg.mxu0
        %v950 = vmul.f32 %v945, 0.35355338
        %952 = vrot.lane.b32.xlu0 %v950, 120
        %v953 = vpop.permute.xlu0 %952
        %955 = vrot.lane.b32.xlu0 %v950, 112
        %v956 = vpop.permute.xlu0 %955
        %958 = vrot.lane.b32.xlu0 %v950, 104
        %v959 = vpop.permute.xlu0 %958
        %v961 = vcombine.low %v950, %v956
        %v962 = vcombine.high %v950, %v956
        %v964 = vunpack.c.l.s4 1983009808
        %v965 = vunpack.c.0.s8 %v964
        %v966 = vlaneseq
        %v967 = vshrl.u32 %v966, 7
        %v968 = vsub.s32 %v965, %v967
        %v969 = vrot.slane %v961, %v968
        %v971 = vunpack.c.l.s4 1983009808
        %v972 = vunpack.c.0.s8 %v971
        %v973 = vlaneseq
        %v974 = vshrl.u32 %v973, 7
        %v975 = vsub.s32 %v972, %v974
        %v976 = vrot.slane %v962, %v975
        %v977 = vcombine.low %v953, %v959
        %v978 = vcombine.high %v953, %v959
        %v980 = vunpack.c.l.s4 1983009808
        %v981 = vunpack.c.0.s8 %v980
        %v982 = vlaneseq
        %v983 = vshrl.u32 %v982, 7
        %v984 = vsub.s32 %v981, %v983
        %v985 = vrot.slane %v977, %v984
        %v987 = vunpack.c.l.s4 1983009808
        %v988 = vunpack.c.0.s8 %v987
        %v989 = vlaneseq
        %v990 = vshrl.u32 %v989, 7
        %v991 = vsub.s32 %v988, %v990
        %v992 = vrot.slane %v978, %v991
        %v993 = vcombine.low %v969, %v985
        %v994 = vcombine.high %v969, %v985
        %v996 = vunpack.c.l.s4 1934713408
        %v997 = vunpack.c.0.s8 %v996
        %v998 = vlaneseq
        %v999 = vshrl.u32 %v998, 7
        %v1000 = vsub.s32 %v997, %v999
        %v1001 = vrot.slane %v993, %v1000
        %v1003 = vunpack.c.l.s4 1934713408
        %v1004 = vunpack.c.0.s8 %v1003
        %v1005 = vlaneseq
        %v1006 = vshrl.u32 %v1005, 7
        %v1007 = vsub.s32 %v1004, %v1006
        %v1008 = vrot.slane %v994, %v1007
        %v1009 = vcombine.low %v976, %v992
        %v1010 = vcombine.high %v976, %v992
        %v1012 = vunpack.c.l.s4 1934713408
        %v1013 = vunpack.c.0.s8 %v1012
        %v1014 = vlaneseq
        %v1015 = vshrl.u32 %v1014, 7
        %v1016 = vsub.s32 %v1013, %v1015
        %v1017 = vrot.slane %v1009, %v1016
        %v1019 = vunpack.c.l.s4 1934713408
        %v1020 = vunpack.c.0.s8 %v1019
        %v1021 = vlaneseq
        %v1022 = vshrl.u32 %v1021, 7
        %v1023 = vsub.s32 %v1020, %v1022
        %v1024 = vrot.slane %v1010, %v1023
        %v1025 = vcombine.high %v1001, 0.0
        %v1026 = vcombine.high %v1008, 0.0
        %v1027 = vcombine.high %v1017, 0.0
        %v1028 = vcombine.high %v1024, 0.0
        %v1029 = vcombine.low %v1001, %v1008
        %v1031 = vunpack.c.l.s4 1983009808
        %v1032 = vunpack.c.0.s8 %v1031
        %v1033 = vlaneseq
        %v1034 = vshrl.u32 %v1033, 7
        %v1035 = vsub.s32 %v1032, %v1034
        %v1036 = vrot.slane %v1029, %v1035
        %v1037 = vcombine.low %v1025, %v1026
        %v1039 = vunpack.c.l.s4 1983009808
        %v1040 = vunpack.c.0.s8 %v1039
        %v1041 = vlaneseq
        %v1042 = vshrl.u32 %v1041, 7
        %v1043 = vsub.s32 %v1040, %v1042
        %v1044 = vrot.slane %v1037, %v1043
        %v1045 = vcombine.low %v1017, %v1024
        %v1047 = vunpack.c.l.s4 1983009808
        %v1048 = vunpack.c.0.s8 %v1047
        %v1049 = vlaneseq
        %v1050 = vshrl.u32 %v1049, 7
        %v1051 = vsub.s32 %v1048, %v1050
        %v1052 = vrot.slane %v1045, %v1051
        %v1053 = vcombine.low %v1027, %v1028
        %v1055 = vunpack.c.l.s4 1983009808
        %v1056 = vunpack.c.0.s8 %v1055
        %v1057 = vlaneseq
        %v1058 = vshrl.u32 %v1057, 7
        %v1059 = vsub.s32 %v1056, %v1058
        %v1060 = vrot.slane %v1053, %v1059
        %v1061 = vcombine.low %v1036, %v1044
        %v1062 = vcombine.high %v1036, %v1044
        %v1064 = vunpack.c.l.s4 1934713408
        %v1065 = vunpack.c.0.s8 %v1064
        %v1066 = vlaneseq
        %v1067 = vshrl.u32 %v1066, 7
        %v1068 = vsub.s32 %v1065, %v1067
        %v1069 = vrot.slane %v1061, %v1068
        %v1071 = vunpack.c.l.s4 1934713408
        %v1072 = vunpack.c.0.s8 %v1071
        %v1073 = vlaneseq
        %v1074 = vshrl.u32 %v1073, 7
        %v1075 = vsub.s32 %v1072, %v1074
        %v1076 = vrot.slane %v1062, %v1075
        %v1077 = vcombine.low %v1052, %v1060
        %v1078 = vcombine.high %v1052, %v1060
        %v1080 = vunpack.c.l.s4 1934713408
        %v1081 = vunpack.c.0.s8 %v1080
        %v1082 = vlaneseq
        %v1083 = vshrl.u32 %v1082, 7
        %v1084 = vsub.s32 %v1081, %v1083
        %v1085 = vrot.slane %v1077, %v1084
        %v1087 = vunpack.c.l.s4 1934713408
        %v1088 = vunpack.c.0.s8 %v1087
        %v1089 = vlaneseq
        %v1090 = vshrl.u32 %v1089, 7
        %v1091 = vsub.s32 %v1088, %v1090
        %v1092 = vrot.slane %v1078, %v1091
        %v1093 = vcombine.low %v1069, %v1085
        %v1094 = vcombine.high %v1069, %v1085
        %v1095 = vcombine.low %v1076, %v1092
        %v1096 = vcombine.high %v1076, %v1092
        %v1097 = vpack.c.bf16 %v1093, %v1093
        %v1098 = vpack.c.bf16 %v1094, %v1094
        %v1099 = vpack.c.bf16 %v1095, %v1095
        %v1100 = vpack.c.bf16 %v1096, %v1096
        %1102 = vrot.lane.b32.xlu0 %v945, 120
        %v1103 = vpop.permute.xlu0 %1102
        %1104 = vrot.lane.b32.xlu0 %v945, 112
        %v1105 = vpop.permute.xlu0 %1104
        %1106 = vrot.lane.b32.xlu0 %v945, 104
        %v1107 = vpop.permute.xlu0 %1106
        %1108 = vrot.lane.b32.xlu0 %v945, 96
        %v1109 = vpop.permute.xlu0 %1108
        %1110 = vrot.lane.b32.xlu0 %v1103, 96
        %v1111 = vpop.permute.xlu0 %1110
        %1112 = vrot.lane.b32.xlu0 %v1105, 96
        %v1113 = vpop.permute.xlu0 %1112
        %1114 = vrot.lane.b32.xlu0 %v1107, 96
        %v1115 = vpop.permute.xlu0 %1114
        %v1120 = vcombine.low %v1109, %v1113
        %v1121 = vcombine.high %v1109, %v1113
        %v1123 = vunpack.c.l.s4 1983009808
        %v1124 = vunpack.c.0.s8 %v1123
        %v1125 = vlaneseq
        %v1126 = vshrl.u32 %v1125, 7
        %v1127 = vsub.s32 %v1124, %v1126
        %v1128 = vrot.slane %v1120, %v1127
        %v1130 = vunpack.c.l.s4 1983009808
        %v1131 = vunpack.c.0.s8 %v1130
        %v1132 = vlaneseq
        %v1133 = vshrl.u32 %v1132, 7
        %v1134 = vsub.s32 %v1131, %v1133
        %v1135 = vrot.slane %v1121, %v1134
        %v1136 = vcombine.low %v1111, %v1115
        %v1137 = vcombine.high %v1111, %v1115
        %v1139 = vunpack.c.l.s4 1983009808
        %v1140 = vunpack.c.0.s8 %v1139
        %v1141 = vlaneseq
        %v1142 = vshrl.u32 %v1141, 7
        %v1143 = vsub.s32 %v1140, %v1142
        %v1144 = vrot.slane %v1136, %v1143
        %v1146 = vunpack.c.l.s4 1983009808
        %v1147 = vunpack.c.0.s8 %v1146
        %v1148 = vlaneseq
        %v1149 = vshrl.u32 %v1148, 7
        %v1150 = vsub.s32 %v1147, %v1149
        %v1151 = vrot.slane %v1137, %v1150
        %v1152 = vcombine.low %v1128, %v1144
        %v1153 = vcombine.high %v1128, %v1144
        %v1155 = vunpack.c.l.s4 1934713408
        %v1156 = vunpack.c.0.s8 %v1155
        %v1157 = vlaneseq
        %v1158 = vshrl.u32 %v1157, 7
        %v1159 = vsub.s32 %v1156, %v1158
        %v1160 = vrot.slane %v1152, %v1159
        %v1162 = vunpack.c.l.s4 1934713408
        %v1163 = vunpack.c.0.s8 %v1162
        %v1164 = vlaneseq
        %v1165 = vshrl.u32 %v1164, 7
        %v1166 = vsub.s32 %v1163, %v1165
        %v1167 = vrot.slane %v1153, %v1166
        %v1168 = vcombine.low %v1135, %v1151
        %v1169 = vcombine.high %v1135, %v1151
        %v1171 = vunpack.c.l.s4 1934713408
        %v1172 = vunpack.c.0.s8 %v1171
        %v1173 = vlaneseq
        %v1174 = vshrl.u32 %v1173, 7
        %v1175 = vsub.s32 %v1172, %v1174
        %v1176 = vrot.slane %v1168, %v1175
        %v1178 = vunpack.c.l.s4 1934713408
        %v1179 = vunpack.c.0.s8 %v1178
        %v1180 = vlaneseq
        %v1181 = vshrl.u32 %v1180, 7
        %v1182 = vsub.s32 %v1179, %v1181
        %v1183 = vrot.slane %v1169, %v1182
        %v1184 = vcombine.high %v1160, 0.0
        %v1185 = vcombine.high %v1167, 0.0
        %v1186 = vcombine.high %v1176, 0.0
        %v1187 = vcombine.high %v1183, 0.0
        %v1188 = vcombine.low %v1160, %v1167
        %v1190 = vunpack.c.l.s4 1983009808
        %v1191 = vunpack.c.0.s8 %v1190
        %v1192 = vlaneseq
        %v1193 = vshrl.u32 %v1192, 7
        %v1194 = vsub.s32 %v1191, %v1193
        %v1195 = vrot.slane %v1188, %v1194
        %v1196 = vcombine.low %v1184, %v1185
        %v1198 = vunpack.c.l.s4 1983009808
        %v1199 = vunpack.c.0.s8 %v1198
        %v1200 = vlaneseq
        %v1201 = vshrl.u32 %v1200, 7
        %v1202 = vsub.s32 %v1199, %v1201
        %v1203 = vrot.slane %v1196, %v1202
        %v1204 = vcombine.low %v1176, %v1183
        %v1206 = vunpack.c.l.s4 1983009808
        %v1207 = vunpack.c.0.s8 %v1206
        %v1208 = vlaneseq
        %v1209 = vshrl.u32 %v1208, 7
        %v1210 = vsub.s32 %v1207, %v1209
        %v1211 = vrot.slane %v1204, %v1210
        %v1212 = vcombine.low %v1186, %v1187
        %v1214 = vunpack.c.l.s4 1983009808
        %v1215 = vunpack.c.0.s8 %v1214
        %v1216 = vlaneseq
        %v1217 = vshrl.u32 %v1216, 7
        %v1218 = vsub.s32 %v1215, %v1217
        %v1219 = vrot.slane %v1212, %v1218
        %v1220 = vcombine.low %v1195, %v1203
        %v1221 = vcombine.high %v1195, %v1203
        %v1223 = vunpack.c.l.s4 1934713408
        %v1224 = vunpack.c.0.s8 %v1223
        %v1225 = vlaneseq
        %v1226 = vshrl.u32 %v1225, 7
        %v1227 = vsub.s32 %v1224, %v1226
        %v1228 = vrot.slane %v1220, %v1227
        %v1230 = vunpack.c.l.s4 1934713408
        %v1231 = vunpack.c.0.s8 %v1230
        %v1232 = vlaneseq
        %v1233 = vshrl.u32 %v1232, 7
        %v1234 = vsub.s32 %v1231, %v1233
        %v1235 = vrot.slane %v1221, %v1234
        %v1236 = vcombine.low %v1211, %v1219
        %v1237 = vcombine.high %v1211, %v1219
        %v1239 = vunpack.c.l.s4 1934713408
        %v1240 = vunpack.c.0.s8 %v1239
        %v1241 = vlaneseq
        %v1242 = vshrl.u32 %v1241, 7
        %v1243 = vsub.s32 %v1240, %v1242
        %v1244 = vrot.slane %v1236, %v1243
        %v1246 = vunpack.c.l.s4 1934713408
        %v1247 = vunpack.c.0.s8 %v1246
        %v1248 = vlaneseq
        %v1249 = vshrl.u32 %v1248, 7
        %v1250 = vsub.s32 %v1247, %v1249
        %v1251 = vrot.slane %v1237, %v1250
        %v1252 = vcombine.low %v1228, %v1244
        %v1253 = vcombine.high %v1228, %v1244
        %v1254 = vcombine.low %v1235, %v1251
        %v1255 = vcombine.high %v1235, %v1251
        %v1256 = vpack.c.bf16 %v1252, %v1252
        %v1257 = vpack.c.bf16 %v1253, %v1253
        %v1258 = vpack.c.bf16 %v1254, %v1254
        %v1259 = vpack.c.bf16 %v1255, %v1255
        %1260 = vrot.lane.b32.xlu0 %v945, 64
        %v1261 = vpop.permute.xlu0 %1260
        %1262 = vrot.lane.b32.xlu0 %v1103, 64
        %v1263 = vpop.permute.xlu0 %1262
        %1264 = vrot.lane.b32.xlu0 %v1105, 64
        %v1265 = vpop.permute.xlu0 %1264
        %1266 = vrot.lane.b32.xlu0 %v1107, 64
        %v1267 = vpop.permute.xlu0 %1266
        %v1272 = vcombine.low %v1261, %v1265
        %v1273 = vcombine.high %v1261, %v1265
        %v1275 = vunpack.c.l.s4 1983009808
        %v1276 = vunpack.c.0.s8 %v1275
        %v1277 = vlaneseq
        %v1278 = vshrl.u32 %v1277, 7
        %v1279 = vsub.s32 %v1276, %v1278
        %v1280 = vrot.slane %v1272, %v1279
        %v1282 = vunpack.c.l.s4 1983009808
        %v1283 = vunpack.c.0.s8 %v1282
        %v1284 = vlaneseq
        %v1285 = vshrl.u32 %v1284, 7
        %v1286 = vsub.s32 %v1283, %v1285
        %v1287 = vrot.slane %v1273, %v1286
        %v1288 = vcombine.low %v1263, %v1267
        %v1289 = vcombine.high %v1263, %v1267
        %v1291 = vunpack.c.l.s4 1983009808
        %v1292 = vunpack.c.0.s8 %v1291
        %v1293 = vlaneseq
        %v1294 = vshrl.u32 %v1293, 7
        %v1295 = vsub.s32 %v1292, %v1294
        %v1296 = vrot.slane %v1288, %v1295
        %v1298 = vunpack.c.l.s4 1983009808
        %v1299 = vunpack.c.0.s8 %v1298
        %v1300 = vlaneseq
        %v1301 = vshrl.u32 %v1300, 7
        %v1302 = vsub.s32 %v1299, %v1301
        %v1303 = vrot.slane %v1289, %v1302
        %v1304 = vcombine.low %v1280, %v1296
        %v1305 = vcombine.high %v1280, %v1296
        %v1307 = vunpack.c.l.s4 1934713408
        %v1308 = vunpack.c.0.s8 %v1307
        %v1309 = vlaneseq
        %v1310 = vshrl.u32 %v1309, 7
        %v1311 = vsub.s32 %v1308, %v1310
        %v1312 = vrot.slane %v1304, %v1311
        %v1314 = vunpack.c.l.s4 1934713408
        %v1315 = vunpack.c.0.s8 %v1314
        %v1316 = vlaneseq
        %v1317 = vshrl.u32 %v1316, 7
        %v1318 = vsub.s32 %v1315, %v1317
        %v1319 = vrot.slane %v1305, %v1318
        %v1320 = vcombine.low %v1287, %v1303
        %v1321 = vcombine.high %v1287, %v1303
        %v1323 = vunpack.c.l.s4 1934713408
        %v1324 = vunpack.c.0.s8 %v1323
        %v1325 = vlaneseq
        %v1326 = vshrl.u32 %v1325, 7
        %v1327 = vsub.s32 %v1324, %v1326
        %v1328 = vrot.slane %v1320, %v1327
        %v1330 = vunpack.c.l.s4 1934713408
        %v1331 = vunpack.c.0.s8 %v1330
        %v1332 = vlaneseq
        %v1333 = vshrl.u32 %v1332, 7
        %v1334 = vsub.s32 %v1331, %v1333
        %v1335 = vrot.slane %v1321, %v1334
        %v1336 = vcombine.high %v1312, 0.0
        %v1337 = vcombine.high %v1319, 0.0
        %v1338 = vcombine.high %v1328, 0.0
        %v1339 = vcombine.high %v1335, 0.0
        %v1340 = vcombine.low %v1312, %v1319
        %v1342 = vunpack.c.l.s4 1983009808
        %v1343 = vunpack.c.0.s8 %v1342
        %v1344 = vlaneseq
        %v1345 = vshrl.u32 %v1344, 7
        %v1346 = vsub.s32 %v1343, %v1345
        %v1347 = vrot.slane %v1340, %v1346
        %v1348 = vcombine.low %v1336, %v1337
        %v1350 = vunpack.c.l.s4 1983009808
        %v1351 = vunpack.c.0.s8 %v1350
        %v1352 = vlaneseq
        %v1353 = vshrl.u32 %v1352, 7
        %v1354 = vsub.s32 %v1351, %v1353
        %v1355 = vrot.slane %v1348, %v1354
        %v1356 = vcombine.low %v1328, %v1335
        %v1358 = vunpack.c.l.s4 1983009808
        %v1359 = vunpack.c.0.s8 %v1358
        %v1360 = vlaneseq
        %v1361 = vshrl.u32 %v1360, 7
        %v1362 = vsub.s32 %v1359, %v1361
        %v1363 = vrot.slane %v1356, %v1362
        %v1364 = vcombine.low %v1338, %v1339
        %v1366 = vunpack.c.l.s4 1983009808
        %v1367 = vunpack.c.0.s8 %v1366
        %v1368 = vlaneseq
        %v1369 = vshrl.u32 %v1368, 7
        %v1370 = vsub.s32 %v1367, %v1369
        %v1371 = vrot.slane %v1364, %v1370
        %v1372 = vcombine.low %v1347, %v1355
        %v1373 = vcombine.high %v1347, %v1355
        %v1375 = vunpack.c.l.s4 1934713408
        %v1376 = vunpack.c.0.s8 %v1375
        %v1377 = vlaneseq
        %v1378 = vshrl.u32 %v1377, 7
        %v1379 = vsub.s32 %v1376, %v1378
        %v1380 = vrot.slane %v1372, %v1379
        %v1382 = vunpack.c.l.s4 1934713408
        %v1383 = vunpack.c.0.s8 %v1382
        %v1384 = vlaneseq
        %v1385 = vshrl.u32 %v1384, 7
        %v1386 = vsub.s32 %v1383, %v1385
        %v1387 = vrot.slane %v1373, %v1386
        %v1388 = vcombine.low %v1363, %v1371
        %v1389 = vcombine.high %v1363, %v1371
        %v1391 = vunpack.c.l.s4 1934713408
        %v1392 = vunpack.c.0.s8 %v1391
        %v1393 = vlaneseq
        %v1394 = vshrl.u32 %v1393, 7
        %v1395 = vsub.s32 %v1392, %v1394
        %v1396 = vrot.slane %v1388, %v1395
        %v1398 = vunpack.c.l.s4 1934713408
        %v1399 = vunpack.c.0.s8 %v1398
        %v1400 = vlaneseq
        %v1401 = vshrl.u32 %v1400, 7
        %v1402 = vsub.s32 %v1399, %v1401
        %v1403 = vrot.slane %v1389, %v1402
        %v1404 = vcombine.low %v1380, %v1396
        %v1405 = vcombine.high %v1380, %v1396
        %v1406 = vcombine.low %v1387, %v1403
        %v1407 = vcombine.high %v1387, %v1403
        %v1408 = vpack.c.bf16 %v1404, %v1404
        %v1409 = vpack.c.bf16 %v1405, %v1405
        %v1410 = vpack.c.bf16 %v1406, %v1406
        %v1411 = vpack.c.bf16 %v1407, %v1407
        %v1412 = vld [vmem:[%s798] sm:$0x1]
        %v1413 = vsub.f32 1.0, %v1412
        %v1414 = vmul.f32 %v1413, -10000.0
        %v1416 = vlaneseq
        %v1417 = vshrl.u32 %v1416, 7
        %v1418 = vsub.s32 0, %v1417
        %v1419 = vrot.slane %v1414, %v1418
        %vm1421 = vcmask 64512
        %v1423 = vsel %vm1421, %v1097, 0
        %v1426 = vsel %vm1421, %v1256, 0
        %1428 = vmatprep.subr.bf16.mxu0 0
        %1429 = vmatpush1.bf16.xpose.msra.mxu0 0
        %1430 = vmatprep.subr.bf16.mxu0 0
        %1431 = vmatpush1.bf16.xpose.msra.mxu0 0
        %1432 = vmatprep.subr.bf16.mxu0 0
        %1433 = vmatpush1.bf16.xpose.msra.mxu0 0
        %1434 = vmatprep.subr.bf16.mxu0 0
        %1435 = vmatpush1.bf16.xpose.msra.mxu0 0
        %1436 = vmatprep.subr.bf16.mxu0 0
        %1437 = vmatpush1.bf16.xpose.msra.mxu0 0
        %1438 = vmatprep.subr.bf16.mxu0 0
        %1439 = vmatpush1.bf16.xpose.msra.mxu0 0
        %1440 = vmatprep.subr.bf16.mxu0 0
        %1441 = vmatpush1.bf16.xpose.msra.mxu0 0
        %1442 = vmatprep.subr.bf16.mxu0 0
        %1443 = vmatpush1.bf16.xpose.msra.mxu0 %v1426
        %1444 = vmatprep.subr.bf16.mxu0 0
        %1445 = vmatpush2.bf16.xpose.msra.mxu0 0
        %1446 = vmatprep.subr.bf16.mxu0 0
        %1447 = vmatpush2.bf16.xpose.msra.mxu0 0
        %1448 = vmatprep.subr.bf16.mxu0 0
        %1449 = vmatpush2.bf16.xpose.msra.mxu0 0
        %1450 = vmatprep.subr.bf16.mxu0 0
        %1451 = vmatpush2.bf16.xpose.msra.mxu0 0
        %1452 = vmatprep.subr.bf16.mxu0 0
        %1453 = vmatpush2.bf16.xpose.msra.mxu0 0
        %1454 = vmatprep.subr.bf16.mxu0 0
        %1455 = vmatpush2.bf16.xpose.msra.mxu0 0
        %1456 = vmatprep.subr.bf16.mxu0 0
        %1457 = vmatpush2.bf16.xpose.msra.mxu0 0
        %1458 = vmatprep.subr.bf16.mxu0 0
        %1459 = vmatpush2.bf16.xpose.msra.mxu0 0
        %1460 = vmatprep.mubr.bf16.mxu0 0
        %1461 = vmatmul.mubr.bf16.gmra.mxu0 %v1423
        %v1462 = vpop.f32.mrf.mxu0
        %v1463 = vadd.f32 %v1419, %v1462
        %v1464 = vpop.f32.mrf.mxu0
        %v1465 = vpop.f32.mrf.mxu0
        %v1466 = vpop.f32.mrf.mxu0
        %1467 = vdwg.mxu0
        %v1469 = vsel %vm1421, %v1098, 0
        %v1472 = vsel %vm1421, %v1257, 0
        %1474 = vmatprep.subr.bf16.mxu0 0
        %1475 = vmatpush1.bf16.xpose.msra.mxu0 0
        %1476 = vmatprep.subr.bf16.mxu0 0
        %1477 = vmatpush1.bf16.xpose.msra.mxu0 0
        %1478 = vmatprep.subr.bf16.mxu0 0
        %1479 = vmatpush1.bf16.xpose.msra.mxu0 0
        %1480 = vmatprep.subr.bf16.mxu0 0
        %1481 = vmatpush1.bf16.xpose.msra.mxu0 0
        %1482 = vmatprep.subr.bf16.mxu0 0
        %1483 = vmatpush1.bf16.xpose.msra.mxu0 0
        %1484 = vmatprep.subr.bf16.mxu0 0
        %1485 = vmatpush1.bf16.xpose.msra.mxu0 0
        %1486 = vmatprep.subr.bf16.mxu0 0
        %1487 = vmatpush1.bf16.xpose.msra.mxu0 0
        %1488 = vmatprep.subr.bf16.mxu0 0
        %1489 = vmatpush1.bf16.xpose.msra.mxu0 %v1472
        %1490 = vmatprep.subr.bf16.mxu0 0
        %1491 = vmatpush2.bf16.xpose.msra.mxu0 0
        %1492 = vmatprep.subr.bf16.mxu0 0
        %1493 = vmatpush2.bf16.xpose.msra.mxu0 0
        %1494 = vmatprep.subr.bf16.mxu0 0
        %1495 = vmatpush2.bf16.xpose.msra.mxu0 0
        %1496 = vmatprep.subr.bf16.mxu0 0
        %1497 = vmatpush2.bf16.xpose.msra.mxu0 0
        %1498 = vmatprep.subr.bf16.mxu0 0
        %1499 = vmatpush2.bf16.xpose.msra.mxu0 0
        %1500 = vmatprep.subr.bf16.mxu0 0
        %1501 = vmatpush2.bf16.xpose.msra.mxu0 0
        %1502 = vmatprep.subr.bf16.mxu0 0
        %1503 = vmatpush2.bf16.xpose.msra.mxu0 0
        %1504 = vmatprep.subr.bf16.mxu0 0
        %1505 = vmatpush2.bf16.xpose.msra.mxu0 0
        %1506 = vmatprep.mubr.bf16.mxu0 0
        %1507 = vmatmul.mubr.bf16.gmra.mxu0 %v1469
        %v1508 = vpop.f32.mrf.mxu0
        %v1509 = vadd.f32 %v1419, %v1508
        %v1510 = vpop.f32.mrf.mxu0
        %v1511 = vpop.f32.mrf.mxu0
        %v1512 = vpop.f32.mrf.mxu0
        %1513 = vdwg.mxu0
        %v1515 = vsel %vm1421, %v1099, 0
        %v1518 = vsel %vm1421, %v1258, 0
        %1520 = vmatprep.subr.bf16.mxu0 0
        %1521 = vmatpush1.bf16.xpose.msra.mxu0 0
        %1522 = vmatprep.subr.bf16.mxu0 0
        %1523 = vmatpush1.bf16.xpose.msra.mxu0 0
        %1524 = vmatprep.subr.bf16.mxu0 0
        %1525 = vmatpush1.bf16.xpose.msra.mxu0 0
        %1526 = vmatprep.subr.bf16.mxu0 0
        %1527 = vmatpush1.bf16.xpose.msra.mxu0 0
        %1528 = vmatprep.subr.bf16.mxu0 0
        %1529 = vmatpush1.bf16.xpose.msra.mxu0 0
        %1530 = vmatprep.subr.bf16.mxu0 0
        %1531 = vmatpush1.bf16.xpose.msra.mxu0 0
        %1532 = vmatprep.subr.bf16.mxu0 0
        %1533 = vmatpush1.bf16.xpose.msra.mxu0 0
        %1534 = vmatprep.subr.bf16.mxu0 0
        %1535 = vmatpush1.bf16.xpose.msra.mxu0 %v1518
        %1536 = vmatprep.subr.bf16.mxu0 0
        %1537 = vmatpush2.bf16.xpose.msra.mxu0 0
        %1538 = vmatprep.subr.bf16.mxu0 0
        %1539 = vmatpush2.bf16.xpose.msra.mxu0 0
        %1540 = vmatprep.subr.bf16.mxu0 0
        %1541 = vmatpush2.bf16.xpose.msra.mxu0 0
        %1542 = vmatprep.subr.bf16.mxu0 0
        %1543 = vmatpush2.bf16.xpose.msra.mxu0 0
        %1544 = vmatprep.subr.bf16.mxu0 0
        %1545 = vmatpush2.bf16.xpose.msra.mxu0 0
        %1546 = vmatprep.subr.bf16.mxu0 0
        %1547 = vmatpush2.bf16.xpose.msra.mxu0 0
        %1548 = vmatprep.subr.bf16.mxu0 0
        %1549 = vmatpush2.bf16.xpose.msra.mxu0 0
        %1550 = vmatprep.subr.bf16.mxu0 0
        %1551 = vmatpush2.bf16.xpose.msra.mxu0 0
        %1552 = vmatprep.mubr.bf16.mxu0 0
        %1553 = vmatmul.mubr.bf16.gmra.mxu0 %v1515
        %v1554 = vpop.f32.mrf.mxu0
        %v1555 = vadd.f32 %v1419, %v1554
        %v1556 = vpop.f32.mrf.mxu0
        %v1557 = vpop.f32.mrf.mxu0
        %v1558 = vpop.f32.mrf.mxu0
        %1559 = vdwg.mxu0
        %v1561 = vsel %vm1421, %v1100, 0
        %v1564 = vsel %vm1421, %v1259, 0
        %1566 = vmatprep.subr.bf16.mxu0 0
        %1567 = vmatpush1.bf16.xpose.msra.mxu0 0
        %1568 = vmatprep.subr.bf16.mxu0 0
        %1569 = vmatpush1.bf16.xpose.msra.mxu0 0
        %1570 = vmatprep.subr.bf16.mxu0 0
        %1571 = vmatpush1.bf16.xpose.msra.mxu0 0
        %1572 = vmatprep.subr.bf16.mxu0 0
        %1573 = vmatpush1.bf16.xpose.msra.mxu0 0
        %1574 = vmatprep.subr.bf16.mxu0 0
        %1575 = vmatpush1.bf16.xpose.msra.mxu0 0
        %1576 = vmatprep.subr.bf16.mxu0 0
        %1577 = vmatpush1.bf16.xpose.msra.mxu0 0
        %1578 = vmatprep.subr.bf16.mxu0 0
        %1579 = vmatpush1.bf16.xpose.msra.mxu0 0
        %1580 = vmatprep.subr.bf16.mxu0 0
        %1581 = vmatpush1.bf16.xpose.msra.mxu0 %v1564
        %1582 = vmatprep.subr.bf16.mxu0 0
        %1583 = vmatpush2.bf16.xpose.msra.mxu0 0
        %1584 = vmatprep.subr.bf16.mxu0 0
        %1585 = vmatpush2.bf16.xpose.msra.mxu0 0
        %1586 = vmatprep.subr.bf16.mxu0 0
        %1587 = vmatpush2.bf16.xpose.msra.mxu0 0
        %1588 = vmatprep.subr.bf16.mxu0 0
        %1589 = vmatpush2.bf16.xpose.msra.mxu0 0
        %1590 = vmatprep.subr.bf16.mxu0 0
        %1591 = vmatpush2.bf16.xpose.msra.mxu0 0
        %1592 = vmatprep.subr.bf16.mxu0 0
        %1593 = vmatpush2.bf16.xpose.msra.mxu0 0
        %1594 = vmatprep.subr.bf16.mxu0 0
        %1595 = vmatpush2.bf16.xpose.msra.mxu0 0
        %1596 = vmatprep.subr.bf16.mxu0 0
        %1597 = vmatpush2.bf16.xpose.msra.mxu0 0
        %1598 = vmatprep.mubr.bf16.mxu0 0
        %1599 = vmatmul.mubr.bf16.gmra.mxu0 %v1561
        %v1600 = vpop.f32.mrf.mxu0
        %v1601 = vadd.f32 %v1419, %v1600
        %v1602 = vpop.f32.mrf.mxu0
        %v1603 = vpop.f32.mrf.mxu0
        %v1604 = vpop.f32.mrf.mxu0
        %1605 = vdwg.mxu0
        %v1606 = vsel %vm1421, %v1463, -inf
        %1607 = vmax.xlane.f32.xlu0 %v1606
        %v1608 = vpop.xlane.xlu0 %1607
        %v1609 = vsel %vm1421, %v1509, -inf
        %1610 = vmax.xlane.f32.xlu0 %v1609
        %v1611 = vpop.xlane.xlu0 %1610
        %v1612 = vsel %vm1421, %v1555, -inf
        %1613 = vmax.xlane.f32.xlu0 %v1612
        %v1614 = vpop.xlane.xlu0 %1613
        %v1615 = vsel %vm1421, %v1601, -inf
        %1616 = vmax.xlane.f32.xlu0 %v1615
        %v1617 = vpop.xlane.xlu0 %1616
        %v1618 = vsub.f32 %v1463, %v1608
        %v1619 = vsub.f32 %v1509, %v1611
        %v1620 = vsub.f32 %v1555, %v1614
        %v1621 = vsub.f32 %v1601, %v1617
        %v1622 = vmul.f32 %v1618, 1.442695
        %v1623 = vpow.pop %v1622
        %v1624 = vmul.f32 %v1619, 1.442695
        %v1625 = vpow.pop %v1624
        %v1626 = vmul.f32 %v1620, 1.442695
        %v1627 = vpow.pop %v1626
        %v1628 = vmul.f32 %v1621, 1.442695
        %v1629 = vpow.pop %v1628
        %v1630 = vsel %vm1421, %v1623, 0.0
        %1631 = vadd.xlane.f32.xlu0 %v1630
        %v1632 = vpop.xlane.xlu0 %1631
        %v1633 = vsel %vm1421, %v1625, 0.0
        %1634 = vadd.xlane.f32.xlu0 %v1633
        %v1635 = vpop.xlane.xlu0 %1634
        %v1636 = vsel %vm1421, %v1627, 0.0
        %1637 = vadd.xlane.f32.xlu0 %v1636
        %v1638 = vpop.xlane.xlu0 %1637
        %v1639 = vsel %vm1421, %v1629, 0.0
        %1640 = vadd.xlane.f32.xlu0 %v1639
        %v1641 = vpop.xlane.xlu0 %1640
        %v1642 = vrcp.pop %v1632
        %v1643 = vrcp.pop %v1635
        %v1644 = vrcp.pop %v1638
        %v1645 = vrcp.pop %v1641
        %v1646 = vmul.f32 %v1623, %v1642
        %v1647 = vmul.f32 %v1625, %v1643
        %v1648 = vmul.f32 %v1627, %v1644
        %v1649 = vmul.f32 %v1629, %v1645
        %v1650 = vpack.c.bf16 %v1646, %v1646
        %v1651 = vpack.c.bf16 %v1647, %v1647
        %v1652 = vpack.c.bf16 %v1648, %v1648
        %v1653 = vpack.c.bf16 %v1649, %v1649
        %v1655 = vsel %vm1421, %v1650, 0
        %vm1657 = vcmask 1043456
        %v1659 = vsel %vm1657, %v1408, 0
        %1661 = vmatprep.subr.bf16.mxu0 0
        %1662 = vmatpush1.bf16.msra.mxu0 0
        %1663 = vmatprep.subr.bf16.mxu0 0
        %1664 = vmatpush1.bf16.msra.mxu0 0
        %1665 = vmatprep.subr.bf16.mxu0 0
        %1666 = vmatpush1.bf16.msra.mxu0 0
        %1667 = vmatprep.subr.bf16.mxu0 0
        %1668 = vmatpush1.bf16.msra.mxu0 0
        %1669 = vmatprep.subr.bf16.mxu0 0
        %1670 = vmatpush1.bf16.msra.mxu0 0
        %1671 = vmatprep.subr.bf16.mxu0 0
        %1672 = vmatpush1.bf16.msra.mxu0 0
        %1673 = vmatprep.subr.bf16.mxu0 0
        %1674 = vmatpush1.bf16.msra.mxu0 0
        %1675 = vmatprep.subr.bf16.mxu0 0
        %1676 = vmatpush1.bf16.msra.mxu0 %v1659
        %1677 = vmatprep.subr.bf16.mxu0 0
        %1678 = vmatpush2.bf16.msra.mxu0 0
        %1679 = vmatprep.subr.bf16.mxu0 0
        %1680 = vmatpush2.bf16.msra.mxu0 0
        %1681 = vmatprep.subr.bf16.mxu0 0
        %1682 = vmatpush2.bf16.msra.mxu0 0
        %1683 = vmatprep.subr.bf16.mxu0 0
        %1684 = vmatpush2.bf16.msra.mxu0 0
        %1685 = vmatprep.subr.bf16.mxu0 0
        %1686 = vmatpush2.bf16.msra.mxu0 0
        %1687 = vmatprep.subr.bf16.mxu0 0
        %1688 = vmatpush2.bf16.msra.mxu0 0
        %1689 = vmatprep.subr.bf16.mxu0 0
        %1690 = vmatpush2.bf16.msra.mxu0 0
        %1691 = vmatprep.subr.bf16.mxu0 0
        %1692 = vmatpush2.bf16.msra.mxu0 0
        %1693 = vmatprep.mubr.bf16.mxu0 0
        %1694 = vmatmul.mubr.bf16.gmra.mxu0 %v1655
        %v1695 = vpop.f32.mrf.mxu0
        %v1696 = vadd.f32 0.0, %v1695
        %v1697 = vpop.f32.mrf.mxu0
        %v1698 = vpop.f32.mrf.mxu0
        %v1699 = vpop.f32.mrf.mxu0
        %1700 = vdwg.mxu0
        %v1702 = vsel %vm1421, %v1651, 0
        %v1705 = vsel %vm1657, %v1409, 0
        %1707 = vmatprep.subr.bf16.mxu0 0
        %1708 = vmatpush1.bf16.msra.mxu0 0
        %1709 = vmatprep.subr.bf16.mxu0 0
        %1710 = vmatpush1.bf16.msra.mxu0 0
        %1711 = vmatprep.subr.bf16.mxu0 0
        %1712 = vmatpush1.bf16.msra.mxu0 0
        %1713 = vmatprep.subr.bf16.mxu0 0
        %1714 = vmatpush1.bf16.msra.mxu0 0
        %1715 = vmatprep.subr.bf16.mxu0 0
        %1716 = vmatpush1.bf16.msra.mxu0 0
        %1717 = vmatprep.subr.bf16.mxu0 0
        %1718 = vmatpush1.bf16.msra.mxu0 0
        %1719 = vmatprep.subr.bf16.mxu0 0
        %1720 = vmatpush1.bf16.msra.mxu0 0
        %1721 = vmatprep.subr.bf16.mxu0 0
        %1722 = vmatpush1.bf16.msra.mxu0 %v1705
        %1723 = vmatprep.subr.bf16.mxu0 0
        %1724 = vmatpush2.bf16.msra.mxu0 0
        %1725 = vmatprep.subr.bf16.mxu0 0
        %1726 = vmatpush2.bf16.msra.mxu0 0
        %1727 = vmatprep.subr.bf16.mxu0 0
        %1728 = vmatpush2.bf16.msra.mxu0 0
        %1729 = vmatprep.subr.bf16.mxu0 0
        %1730 = vmatpush2.bf16.msra.mxu0 0
        %1731 = vmatprep.subr.bf16.mxu0 0
        %1732 = vmatpush2.bf16.msra.mxu0 0
        %1733 = vmatprep.subr.bf16.mxu0 0
        %1734 = vmatpush2.bf16.msra.mxu0 0
        %1735 = vmatprep.subr.bf16.mxu0 0
        %1736 = vmatpush2.bf16.msra.mxu0 0
        %1737 = vmatprep.subr.bf16.mxu0 0
        %1738 = vmatpush2.bf16.msra.mxu0 0
        %1739 = vmatprep.mubr.bf16.mxu0 0
        %1740 = vmatmul.mubr.bf16.gmra.mxu0 %v1702
        %v1741 = vpop.f32.mrf.mxu0
        %v1742 = vadd.f32 0.0, %v1741
        %v1743 = vpop.f32.mrf.mxu0
        %v1744 = vpop.f32.mrf.mxu0
        %v1745 = vpop.f32.mrf.mxu0
        %1746 = vdwg.mxu0
        %v1748 = vsel %vm1421, %v1652, 0
        %v1751 = vsel %vm1657, %v1410, 0
        %1753 = vmatprep.subr.bf16.mxu0 0
        %1754 = vmatpush1.bf16.msra.mxu0 0
        %1755 = vmatprep.subr.bf16.mxu0 0
        %1756 = vmatpush1.bf16.msra.mxu0 0
        %1757 = vmatprep.subr.bf16.mxu0 0
        %1758 = vmatpush1.bf16.msra.mxu0 0
        %1759 = vmatprep.subr.bf16.mxu0 0
        %1760 = vmatpush1.bf16.msra.mxu0 0
        %1761 = vmatprep.subr.bf16.mxu0 0
        %1762 = vmatpush1.bf16.msra.mxu0 0
        %1763 = vmatprep.subr.bf16.mxu0 0
        %1764 = vmatpush1.bf16.msra.mxu0 0
        %1765 = vmatprep.subr.bf16.mxu0 0
        %1766 = vmatpush1.bf16.msra.mxu0 0
        %1767 = vmatprep.subr.bf16.mxu0 0
        %1768 = vmatpush1.bf16.msra.mxu0 %v1751
        %1769 = vmatprep.subr.bf16.mxu0 0
        %1770 = vmatpush2.bf16.msra.mxu0 0
        %1771 = vmatprep.subr.bf16.mxu0 0
        %1772 = vmatpush2.bf16.msra.mxu0 0
        %1773 = vmatprep.subr.bf16.mxu0 0
        %1774 = vmatpush2.bf16.msra.mxu0 0
        %1775 = vmatprep.subr.bf16.mxu0 0
        %1776 = vmatpush2.bf16.msra.mxu0 0
        %1777 = vmatprep.subr.bf16.mxu0 0
        %1778 = vmatpush2.bf16.msra.mxu0 0
        %1779 = vmatprep.subr.bf16.mxu0 0
        %1780 = vmatpush2.bf16.msra.mxu0 0
        %1781 = vmatprep.subr.bf16.mxu0 0
        %1782 = vmatpush2.bf16.msra.mxu0 0
        %1783 = vmatprep.subr.bf16.mxu0 0
        %1784 = vmatpush2.bf16.msra.mxu0 0
        %1785 = vmatprep.mubr.bf16.mxu0 0
        %1786 = vmatmul.mubr.bf16.gmra.mxu0 %v1748
        %v1787 = vpop.f32.mrf.mxu0
        %v1788 = vadd.f32 0.0, %v1787
        %v1789 = vpop.f32.mrf.mxu0
        %v1790 = vpop.f32.mrf.mxu0
        %v1791 = vpop.f32.mrf.mxu0
        %1792 = vdwg.mxu0
        %v1794 = vsel %vm1421, %v1653, 0
        %v1797 = vsel %vm1657, %v1411, 0
        %1799 = vmatprep.subr.bf16.mxu0 0
        %1800 = vmatpush1.bf16.msra.mxu0 0
        %1801 = vmatprep.subr.bf16.mxu0 0
        %1802 = vmatpush1.bf16.msra.mxu0 0
        %1803 = vmatprep.subr.bf16.mxu0 0
        %1804 = vmatpush1.bf16.msra.mxu0 0
        %1805 = vmatprep.subr.bf16.mxu0 0
        %1806 = vmatpush1.bf16.msra.mxu0 0
        %1807 = vmatprep.subr.bf16.mxu0 0
        %1808 = vmatpush1.bf16.msra.mxu0 0
        %1809 = vmatprep.subr.bf16.mxu0 0
        %1810 = vmatpush1.bf16.msra.mxu0 0
        %1811 = vmatprep.subr.bf16.mxu0 0
        %1812 = vmatpush1.bf16.msra.mxu0 0
        %1813 = vmatprep.subr.bf16.mxu0 0
        %1814 = vmatpush1.bf16.msra.mxu0 %v1797
        %1815 = vmatprep.subr.bf16.mxu0 0
        %1816 = vmatpush2.bf16.msra.mxu0 0
        %1817 = vmatprep.subr.bf16.mxu0 0
        %1818 = vmatpush2.bf16.msra.mxu0 0
        %1819 = vmatprep.subr.bf16.mxu0 0
        %1820 = vmatpush2.bf16.msra.mxu0 0
        %1821 = vmatprep.subr.bf16.mxu0 0
        %1822 = vmatpush2.bf16.msra.mxu0 0
        %1823 = vmatprep.subr.bf16.mxu0 0
        %1824 = vmatpush2.bf16.msra.mxu0 0
        %1825 = vmatprep.subr.bf16.mxu0 0
        %1826 = vmatpush2.bf16.msra.mxu0 0
        %1827 = vmatprep.subr.bf16.mxu0 0
        %1828 = vmatpush2.bf16.msra.mxu0 0
        %1829 = vmatprep.subr.bf16.mxu0 0
        %1830 = vmatpush2.bf16.msra.mxu0 0
        %1831 = vmatprep.mubr.bf16.mxu0 0
        %1832 = vmatmul.mubr.bf16.gmra.mxu0 %v1794
        %v1833 = vpop.f32.mrf.mxu0
        %v1834 = vadd.f32 0.0, %v1833
        %v1835 = vpop.f32.mrf.mxu0
        %v1836 = vpop.f32.mrf.mxu0
        %v1837 = vpop.f32.mrf.mxu0
        %1838 = vdwg.mxu0
        %v1839 = vcombine.low %v1696, %v1788
        %v1840 = vcombine.high %v1696, %v1788
        %v1842 = vunpack.c.l.s4 1983009808
        %v1843 = vunpack.c.0.s8 %v1842
        %v1844 = vlaneseq
        %v1845 = vshrl.u32 %v1844, 7
        %v1846 = vsub.s32 %v1843, %v1845
        %v1847 = vrot.slane %v1839, %v1846
        %v1849 = vunpack.c.l.s4 1983009808
        %v1850 = vunpack.c.0.s8 %v1849
        %v1851 = vlaneseq
        %v1852 = vshrl.u32 %v1851, 7
        %v1853 = vsub.s32 %v1850, %v1852
        %v1854 = vrot.slane %v1840, %v1853
        %v1855 = vcombine.low %v1742, %v1834
        %v1856 = vcombine.high %v1742, %v1834
        %v1858 = vunpack.c.l.s4 1983009808
        %v1859 = vunpack.c.0.s8 %v1858
        %v1860 = vlaneseq
        %v1861 = vshrl.u32 %v1860, 7
        %v1862 = vsub.s32 %v1859, %v1861
        %v1863 = vrot.slane %v1855, %v1862
        %v1865 = vunpack.c.l.s4 1983009808
        %v1866 = vunpack.c.0.s8 %v1865
        %v1867 = vlaneseq
        %v1868 = vshrl.u32 %v1867, 7
        %v1869 = vsub.s32 %v1866, %v1868
        %v1870 = vrot.slane %v1856, %v1869
        %v1871 = vcombine.low %v1847, %v1863
        %v1872 = vcombine.high %v1847, %v1863
        %v1874 = vunpack.c.l.s4 1934713408
        %v1875 = vunpack.c.0.s8 %v1874
        %v1876 = vlaneseq
        %v1877 = vshrl.u32 %v1876, 7
        %v1878 = vsub.s32 %v1875, %v1877
        %v1879 = vrot.slane %v1871, %v1878
        %v1881 = vunpack.c.l.s4 1934713408
        %v1882 = vunpack.c.0.s8 %v1881
        %v1883 = vlaneseq
        %v1884 = vshrl.u32 %v1883, 7
        %v1885 = vsub.s32 %v1882, %v1884
        %v1886 = vrot.slane %v1872, %v1885
        %v1887 = vcombine.low %v1854, %v1870
        %v1888 = vcombine.high %v1854, %v1870
        %v1890 = vunpack.c.l.s4 1934713408
        %v1891 = vunpack.c.0.s8 %v1890
        %v1892 = vlaneseq
        %v1893 = vshrl.u32 %v1892, 7
        %v1894 = vsub.s32 %v1891, %v1893
        %v1895 = vrot.slane %v1887, %v1894
        %v1897 = vunpack.c.l.s4 1934713408
        %v1898 = vunpack.c.0.s8 %v1897
        %v1899 = vlaneseq
        %v1900 = vshrl.u32 %v1899, 7
        %v1901 = vsub.s32 %v1898, %v1900
        %v1902 = vrot.slane %v1888, %v1901
        %v1903 = vcombine.high %v1879, 0.0
        %v1904 = vcombine.high %v1886, 0.0
        %v1905 = vcombine.high %v1895, 0.0
        %v1906 = vcombine.high %v1902, 0.0
        %v1907 = vcombine.low %v1879, %v1886
        %v1909 = vunpack.c.l.s4 1983009808
        %v1910 = vunpack.c.0.s8 %v1909
        %v1911 = vlaneseq
        %v1912 = vshrl.u32 %v1911, 7
        %v1913 = vsub.s32 %v1910, %v1912
        %v1914 = vrot.slane %v1907, %v1913
        %v1915 = vcombine.low %v1903, %v1904
        %v1917 = vunpack.c.l.s4 1983009808
        %v1918 = vunpack.c.0.s8 %v1917
        %v1919 = vlaneseq
        %v1920 = vshrl.u32 %v1919, 7
        %v1921 = vsub.s32 %v1918, %v1920
        %v1922 = vrot.slane %v1915, %v1921
        %v1923 = vcombine.low %v1895, %v1902
        %v1925 = vunpack.c.l.s4 1983009808
        %v1926 = vunpack.c.0.s8 %v1925
        %v1927 = vlaneseq
        %v1928 = vshrl.u32 %v1927, 7
        %v1929 = vsub.s32 %v1926, %v1928
        %v1930 = vrot.slane %v1923, %v1929
        %v1931 = vcombine.low %v1905, %v1906
        %v1933 = vunpack.c.l.s4 1983009808
        %v1934 = vunpack.c.0.s8 %v1933
        %v1935 = vlaneseq
        %v1936 = vshrl.u32 %v1935, 7
        %v1937 = vsub.s32 %v1934, %v1936
        %v1938 = vrot.slane %v1931, %v1937
        %v1939 = vcombine.low %v1914, %v1922
        %v1940 = vcombine.high %v1914, %v1922
        %v1942 = vunpack.c.l.s4 1934713408
        %v1943 = vunpack.c.0.s8 %v1942
        %v1944 = vlaneseq
        %v1945 = vshrl.u32 %v1944, 7
        %v1946 = vsub.s32 %v1943, %v1945
        %v1947 = vrot.slane %v1939, %v1946
        %v1949 = vunpack.c.l.s4 1934713408
        %v1950 = vunpack.c.0.s8 %v1949
        %v1951 = vlaneseq
        %v1952 = vshrl.u32 %v1951, 7
        %v1953 = vsub.s32 %v1950, %v1952
        %v1954 = vrot.slane %v1940, %v1953
        %v1955 = vcombine.low %v1930, %v1938
        %v1956 = vcombine.high %v1930, %v1938
        %v1958 = vunpack.c.l.s4 1934713408
        %v1959 = vunpack.c.0.s8 %v1958
        %v1960 = vlaneseq
        %v1961 = vshrl.u32 %v1960, 7
        %v1962 = vsub.s32 %v1959, %v1961
        %v1963 = vrot.slane %v1955, %v1962
        %v1965 = vunpack.c.l.s4 1934713408
        %v1966 = vunpack.c.0.s8 %v1965
        %v1967 = vlaneseq
        %v1968 = vshrl.u32 %v1967, 7
        %v1969 = vsub.s32 %v1966, %v1968
        %v1970 = vrot.slane %v1956, %v1969
        %v1971 = vcombine.low %v1947, %v1963
        %v1972 = vcombine.high %v1947, %v1963
        %v1973 = vcombine.low %v1954, %v1970
        %v1974 = vcombine.high %v1954, %v1970
        %1976 = vrot.lane.b32.xlu0 %v1972, 8
        %v1977 = vpop.permute.xlu0 %1976
        %1980 = vrot.lane.b32.xlu0 %v1973, 16
        %v1981 = vpop.permute.xlu0 %1980
        %1984 = vrot.lane.b32.xlu0 %v1974, 24
        %v1985 = vpop.permute.xlu0 %1984
        %v1987 = vsel %vm1421, %v1971, %v1977
        %vm1988 = vcmask 130048
        %v1989 = vsel %vm1988, %v1987, %v1981
        %vm1990 = vcmask 195584
        %v1991 = vsel %vm1990, %v1989, %v1985
        %v1992 = vpack.c.bf16 %v1991, %v1991
        %v1993 = vld [vmem:[%s811] sm:$0xf]
        %v1994 = vld [vmem:[%s811 + $0x4] sm:$0xf]
        %v1995 = vld [vmem:[%s811 + $0x8] sm:$0xf]
        %v1996 = vld [vmem:[%s811 + $0xc] sm:$0xf]
        %v1997 = vld [vmem:[%s814] sm:$0x1]
        %v1999 = vlaneseq
        %v2000 = vshrl.u32 %v1999, 7
        %v2001 = vsub.s32 0, %v2000
        %v2002 = vrot.slane %v1997, %v2001
        %v2008 = vunpack.c.l.b16 %v1993
        %v2009 = vunpack.c.l.b16 %v1994
        %v2010 = vunpack.c.l.b16 %v1995
        %v2011 = vunpack.c.l.b16 %v1996
        %v2012 = vpack.c.b16 %v2009, %v2008
        %v2013 = vpack.c.b16 %v2011, %v2010
        %v2017 = vsel %vm906, %v1992, 0
        %2019 = vmatprep.subr.bf16.mxu0 0
        %2020 = vmatpush1.bf16.msra.mxu0 0
        %2021 = vmatprep.subr.bf16.mxu0 0
        %2022 = vmatpush1.bf16.msra.mxu0 0
        %2023 = vmatprep.subr.bf16.mxu0 0
        %2024 = vmatpush1.bf16.msra.mxu0 0
        %2025 = vmatprep.subr.bf16.mxu0 0
        %2026 = vmatpush1.bf16.msra.mxu0 0
        %2027 = vmatprep.subr.bf16.mxu0 0
        %2028 = vmatpush1.bf16.msra.mxu0 0
        %2029 = vmatprep.subr.bf16.mxu0 0
        %2030 = vmatpush1.bf16.msra.mxu0 0
        %2031 = vmatprep.subr.bf16.mxu0 0
        %2032 = vmatpush1.bf16.msra.mxu0 %v2013
        %2033 = vmatprep.subr.bf16.mxu0 0
        %2034 = vmatpush1.bf16.msra.mxu0 %v2012
        %2035 = vmatprep.subr.bf16.mxu0 0
        %2036 = vmatpush2.bf16.msra.mxu0 0
        %2037 = vmatprep.subr.bf16.mxu0 0
        %2038 = vmatpush2.bf16.msra.mxu0 0
        %2039 = vmatprep.subr.bf16.mxu0 0
        %2040 = vmatpush2.bf16.msra.mxu0 0
        %2041 = vmatprep.subr.bf16.mxu0 0
        %2042 = vmatpush2.bf16.msra.mxu0 0
        %2043 = vmatprep.subr.bf16.mxu0 0
        %2044 = vmatpush2.bf16.msra.mxu0 0
        %2045 = vmatprep.subr.bf16.mxu0 0
        %2046 = vmatpush2.bf16.msra.mxu0 0
        %2047 = vmatprep.subr.bf16.mxu0 0
        %2048 = vmatpush2.bf16.msra.mxu0 0
        %2049 = vmatprep.subr.bf16.mxu0 0
        %2050 = vmatpush2.bf16.msra.mxu0 0
        %2051 = vmatprep.mubr.bf16.mxu0 0
        %2052 = vmatmul.mubr.bf16.gmra.mxu0 %v2017
        %v2053 = vpop.f32.mrf.mxu0
        %v2054 = vadd.f32 %v2002, %v2053
        %v2055 = vpop.f32.mrf.mxu0
        %v2056 = vpop.f32.mrf.mxu0
        %v2057 = vpop.f32.mrf.mxu0
        %2058 = vdwg.mxu0
        %v2059 = vadd.f32 %v2054, %v881
        %v2060 = vld [vmem:[%s817] sm:$0x1]
        %v2061 = vld [vmem:[%s820] sm:$0x1]
        %v2062 = vsel %vm906, %v2059, 0.0
        %2063 = vadd.xlane.f32.xlu0 %v2062
        %v2064 = vpop.xlane.xlu0 %2063
        %v2065 = vrcp.pop 32.0
        %v2066 = vmul.f32 %v2064, %v2065
        %v2067 = vsub.f32 %v2059, %v2066
        %v2068 = vmul.f32 %v2067, %v2067
        %v2069 = vsel %vm906, %v2068, 0.0
        %2070 = vadd.xlane.f32.xlu0 %v2069
        %v2071 = vpop.xlane.xlu0 %2070
        %v2072 = vmul.f32 %v2071, %v2065
        %v2073 = vadd.f32 %v2072, 1e-05
        %v2074 = vrsqrt.pop %v2073
        %v2075 = vmul.f32 %v2067, %v2074
        %v2077 = vlaneseq
        %v2078 = vshrl.u32 %v2077, 7
        %v2079 = vsub.s32 0, %v2078
        %v2080 = vrot.slane %v2060, %v2079
        %v2082 = vmul.f32 %v2075, %v2080
        %v2084 = vlaneseq
        %v2085 = vshrl.u32 %v2084, 7
        %v2086 = vsub.s32 0, %v2085
        %v2087 = vrot.slane %v2061, %v2086
        %v2089 = vadd.f32 %v2082, %v2087
        %v2090 = vpack.c.bf16 %v2089, %v2089
        %v2091 = vld [vmem:[%s825] sm:$0xf]
        %v2092 = vld [vmem:[%s825 + $0x4] sm:$0xf]
        %v2093 = vld [vmem:[%s825 + $0x8] sm:$0xf]
        %v2094 = vld [vmem:[%s825 + $0xc] sm:$0xf]
        %v2095 = vld [vmem:[%s828] sm:$0x1]
        %v2097 = vlaneseq
        %v2098 = vshrl.u32 %v2097, 7
        %v2099 = vsub.s32 0, %v2098
        %v2100 = vrot.slane %v2095, %v2099
        %v2106 = vunpack.c.l.b16 %v2091
        %v2107 = vunpack.c.l.b16 %v2092
        %v2108 = vunpack.c.l.b16 %v2093
        %v2109 = vunpack.c.l.b16 %v2094
        %v2110 = vpack.c.b16 %v2107, %v2106
        %v2111 = vpack.c.b16 %v2109, %v2108
        %v2115 = vsel %vm906, %v2090, 0
        %2117 = vmatprep.subr.bf16.mxu0 0
        %2118 = vmatpush1.bf16.msra.mxu0 0
        %2119 = vmatprep.subr.bf16.mxu0 0
        %2120 = vmatpush1.bf16.msra.mxu0 0
        %2121 = vmatprep.subr.bf16.mxu0 0
        %2122 = vmatpush1.bf16.msra.mxu0 0
        %2123 = vmatprep.subr.bf16.mxu0 0
        %2124 = vmatpush1.bf16.msra.mxu0 0
        %2125 = vmatprep.subr.bf16.mxu0 0
        %2126 = vmatpush1.bf16.msra.mxu0 0
        %2127 = vmatprep.subr.bf16.mxu0 0
        %2128 = vmatpush1.bf16.msra.mxu0 0
        %2129 = vmatprep.subr.bf16.mxu0 0
        %2130 = vmatpush1.bf16.msra.mxu0 %v2111
        %2131 = vmatprep.subr.bf16.mxu0 0
        %2132 = vmatpush1.bf16.msra.mxu0 %v2110
        %2133 = vmatprep.subr.bf16.mxu0 0
        %2134 = vmatpush2.bf16.msra.mxu0 0
        %2135 = vmatprep.subr.bf16.mxu0 0
        %2136 = vmatpush2.bf16.msra.mxu0 0
        %2137 = vmatprep.subr.bf16.mxu0 0
        %2138 = vmatpush2.bf16.msra.mxu0 0
        %2139 = vmatprep.subr.bf16.mxu0 0
        %2140 = vmatpush2.bf16.msra.mxu0 0
        %2141 = vmatprep.subr.bf16.mxu0 0
        %2142 = vmatpush2.bf16.msra.mxu0 0
        %2143 = vmatprep.subr.bf16.mxu0 0
        %2144 = vmatpush2.bf16.msra.mxu0 0
        %2145 = vmatprep.subr.bf16.mxu0 0
        %2146 = vmatpush2.bf16.msra.mxu0 0
        %2147 = vmatprep.subr.bf16.mxu0 0
        %2148 = vmatpush2.bf16.msra.mxu0 0
        %2149 = vmatprep.mubr.bf16.mxu0 0
        %2150 = vmatmul.mubr.bf16.gmra.mxu0 %v2115
        %v2151 = vpop.f32.mrf.mxu0
        %v2152 = vadd.f32 %v2100, %v2151
        %v2153 = vpop.f32.mrf.mxu0
        %v2154 = vpop.f32.mrf.mxu0
        %v2155 = vpop.f32.mrf.mxu0
        %2156 = vdwg.mxu0
        %v2157 = vmul.f32 %v2152, %v2152
        %v2158 = vmul.f32 %v2152, %v2157
        %v2159 = vmul.f32 %v2158, 0.044715
        %v2160 = vadd.f32 %v2152, %v2159
        %v2161 = vmul.f32 %v2160, 0.7978846
        %v2162 = vtanh.pop %v2161
        %v2163 = vadd.f32 %v2162, 1.0
        %v2164 = vmul.f32 %v2163, 0.5
        %v2165 = vmul.f32 %v2152, %v2164
        %v2166 = vpack.c.bf16 %v2165, %v2165
        %v2167 = vld [vmem:[%s833] sm:$0xf]
        %v2168 = vld [vmem:[%s833 + $0x4] sm:$0xf]
        %v2169 = vld [vmem:[%s833 + $0x8] sm:$0xf]
        %v2170 = vld [vmem:[%s833 + $0xc] sm:$0xf]
        %v2171 = vld [vmem:[%s833 + $0x10] sm:$0xf]
        %v2172 = vld [vmem:[%s833 + $0x14] sm:$0xf]
        %v2173 = vld [vmem:[%s833 + $0x18] sm:$0xf]
        %v2174 = vld [vmem:[%s833 + $0x1c] sm:$0xf]
        %v2175 = vld [vmem:[%s833 + $0x20] sm:$0xf]
        %v2176 = vld [vmem:[%s833 + $0x24] sm:$0xf]
        %v2177 = vld [vmem:[%s833 + $0x28] sm:$0xf]
        %v2178 = vld [vmem:[%s833 + $0x2c] sm:$0xf]
        %v2179 = vld [vmem:[%s833 + $0x30] sm:$0xf]
        %v2180 = vld [vmem:[%s833 + $0x34] sm:$0xf]
        %v2181 = vld [vmem:[%s833 + $0x38] sm:$0xf]
        %v2182 = vld [vmem:[%s833 + $0x3c] sm:$0xf]
        %v2183 = vld [vmem:[%s836] sm:$0x1]
        %v2185 = vlaneseq
        %v2186 = vshrl.u32 %v2185, 7
        %v2187 = vsub.s32 0, %v2186
        %v2188 = vrot.slane %v2183, %v2187
        %v2206 = vunpack.c.l.b16 %v2167
        %v2207 = vunpack.c.l.b16 %v2168
        %v2208 = vunpack.c.l.b16 %v2169
        %v2209 = vunpack.c.l.b16 %v2170
        %v2210 = vunpack.c.l.b16 %v2171
        %v2211 = vunpack.c.l.b16 %v2172
        %v2212 = vunpack.c.l.b16 %v2173
        %v2213 = vunpack.c.l.b16 %v2174
        %v2214 = vunpack.c.l.b16 %v2175
        %v2215 = vunpack.c.l.b16 %v2176
        %v2216 = vunpack.c.l.b16 %v2177
        %v2217 = vunpack.c.l.b16 %v2178
        %v2218 = vunpack.c.l.b16 %v2179
        %v2219 = vunpack.c.l.b16 %v2180
        %v2220 = vunpack.c.l.b16 %v2181
        %v2221 = vunpack.c.l.b16 %v2182
        %v2222 = vpack.c.b16 %v2207, %v2206
        %v2223 = vpack.c.b16 %v2209, %v2208
        %v2224 = vpack.c.b16 %v2211, %v2210
        %v2225 = vpack.c.b16 %v2213, %v2212
        %v2226 = vpack.c.b16 %v2215, %v2214
        %v2227 = vpack.c.b16 %v2217, %v2216
        %v2228 = vpack.c.b16 %v2219, %v2218
        %v2229 = vpack.c.b16 %v2221, %v2220
        %2238 = vmatprep.subr.bf16.mxu0 0
        %2239 = vmatpush1.bf16.msra.mxu0 %v2229
        %2240 = vmatprep.subr.bf16.mxu0 0
        %2241 = vmatpush1.bf16.msra.mxu0 %v2228
        %2242 = vmatprep.subr.bf16.mxu0 0
        %2243 = vmatpush1.bf16.msra.mxu0 %v2227
        %2244 = vmatprep.subr.bf16.mxu0 0
        %2245 = vmatpush1.bf16.msra.mxu0 %v2226
        %2246 = vmatprep.subr.bf16.mxu0 0
        %2247 = vmatpush1.bf16.msra.mxu0 %v2225
        %2248 = vmatprep.subr.bf16.mxu0 0
        %2249 = vmatpush1.bf16.msra.mxu0 %v2224
        %2250 = vmatprep.subr.bf16.mxu0 0
        %2251 = vmatpush1.bf16.msra.mxu0 %v2223
        %2252 = vmatprep.subr.bf16.mxu0 0
        %2253 = vmatpush1.bf16.msra.mxu0 %v2222
        %2254 = vmatprep.subr.bf16.mxu0 0
        %2255 = vmatpush2.bf16.msra.mxu0 0
        %2256 = vmatprep.subr.bf16.mxu0 0
        %2257 = vmatpush2.bf16.msra.mxu0 0
        %2258 = vmatprep.subr.bf16.mxu0 0
        %2259 = vmatpush2.bf16.msra.mxu0 0
        %2260 = vmatprep.subr.bf16.mxu0 0
        %2261 = vmatpush2.bf16.msra.mxu0 0
        %2262 = vmatprep.subr.bf16.mxu0 0
        %2263 = vmatpush2.bf16.msra.mxu0 0
        %2264 = vmatprep.subr.bf16.mxu0 0
        %2265 = vmatpush2.bf16.msra.mxu0 0
        %2266 = vmatprep.subr.bf16.mxu0 0
        %2267 = vmatpush2.bf16.msra.mxu0 0
        %2268 = vmatprep.subr.bf16.mxu0 0
        %2269 = vmatpush2.bf16.msra.mxu0 0
        %2270 = vmatprep.mubr.bf16.mxu0 0
        %2271 = vmatmul.mubr.bf16.gmra.mxu0 %v2166
        %v2272 = vpop.f32.mrf.mxu0
        %v2273 = vadd.f32 %v2188, %v2272
        %v2274 = vpop.f32.mrf.mxu0
        %v2275 = vpop.f32.mrf.mxu0
        %v2276 = vpop.f32.mrf.mxu0
        %2277 = vdwg.mxu0
        %v2278 = vadd.f32 %v2273, %v2089
        %v2279 = vld [vmem:[%s839] sm:$0x1]
        %v2280 = vld [vmem:[%s842] sm:$0x1]
        %v2281 = vsel %vm906, %v2278, 0.0
        %2282 = vadd.xlane.f32.xlu0 %v2281
        %v2283 = vpop.xlane.xlu0 %2282
        %v2284 = vmul.f32 %v2283, %v2065
        %v2285 = vsub.f32 %v2278, %v2284
        %v2286 = vmul.f32 %v2285, %v2285
        %v2287 = vsel %vm906, %v2286, 0.0
        %2288 = vadd.xlane.f32.xlu0 %v2287
        %v2289 = vpop.xlane.xlu0 %2288
        %v2290 = vmul.f32 %v2289, %v2065
        %v2291 = vadd.f32 %v2290, 1e-05
        %v2292 = vrsqrt.pop %v2291
        %v2293 = vmul.f32 %v2285, %v2292
        %v2295 = vlaneseq
        %v2296 = vshrl.u32 %v2295, 7
        %v2297 = vsub.s32 0, %v2296
        %v2298 = vrot.slane %v2279, %v2297
        %v2300 = vmul.f32 %v2293, %v2298
        %v2302 = vlaneseq
        %v2303 = vshrl.u32 %v2302, 7
        %v2304 = vsub.s32 0, %v2303
        %v2305 = vrot.slane %v2280, %v2304
        %v2307 = vadd.f32 %v2300, %v2305
        %2308 = vst.msk [vmem:[#allocation2] sm:$0xff] %vm906, %v2307
        %p2309 = scmp.eq.s32.totalorder %s39, 1
        // Predicated region
        $region105: #{tpu_custom_call.1} parent=99 // pred_check
          %p2310 = pneg %p2309
        $region106: #{tpu_custom_call.1} parent=99 // pred_check_branch
          %2312 = sbr.rel (%p2310) target = $region108
        $region107: #{tpu_custom_call.1} parent=99 // pred_region
          %v2313 = vpack.c.bf16 %v2307, %v2307
          %v2314 = vld [vmem:[%s16] sm:$0xf]
          %v2315 = vld [vmem:[%s16 + $0x4] sm:$0xf]
          %v2316 = vld [vmem:[%s16 + $0x8] sm:$0xf]
          %v2317 = vld [vmem:[%s16 + $0xc] sm:$0xf]
          %v2318 = vld [vmem:[%s17] sm:$0x1]
          %v2323 = vunpack.c.l.b16 %v2314
          %v2324 = vunpack.c.l.b16 %v2315
          %v2325 = vunpack.c.l.b16 %v2316
          %v2326 = vunpack.c.l.b16 %v2317
          %v2327 = vpack.c.b16 %v2324, %v2323
          %v2328 = vpack.c.b16 %v2326, %v2325
          %v2332 = vsel %vm906, %v2313, 0
          %2334 = vmatprep.subr.bf16.mxu0 0
          %2335 = vmatpush1.bf16.msra.mxu0 0
          %2336 = vmatprep.subr.bf16.mxu0 0
          %2337 = vmatpush1.bf16.msra.mxu0 0
          %2338 = vmatprep.subr.bf16.mxu0 0
          %2339 = vmatpush1.bf16.msra.mxu0 0
          %2340 = vmatprep.subr.bf16.mxu0 0
          %2341 = vmatpush1.bf16.msra.mxu0 0
          %2342 = vmatprep.subr.bf16.mxu0 0
          %2343 = vmatpush1.bf16.msra.mxu0 0
          %2344 = vmatprep.subr.bf16.mxu0 0
          %2345 = vmatpush1.bf16.msra.mxu0 0
          %2346 = vmatprep.subr.bf16.mxu0 0
          %2347 = vmatpush1.bf16.msra.mxu0 %v2328
          %2348 = vmatprep.subr.bf16.mxu0 0
          %2349 = vmatpush1.bf16.msra.mxu0 %v2327
          %2350 = vmatprep.subr.bf16.mxu0 0
          %2351 = vmatpush2.bf16.msra.mxu0 0
          %2352 = vmatprep.subr.bf16.mxu0 0
          %2353 = vmatpush2.bf16.msra.mxu0 0
          %2354 = vmatprep.subr.bf16.mxu0 0
          %2355 = vmatpush2.bf16.msra.mxu0 0
          %2356 = vmatprep.subr.bf16.mxu0 0
          %2357 = vmatpush2.bf16.msra.mxu0 0
          %2358 = vmatprep.subr.bf16.mxu0 0
          %2359 = vmatpush2.bf16.msra.mxu0 0
          %2360 = vmatprep.subr.bf16.mxu0 0
          %2361 = vmatpush2.bf16.msra.mxu0 0
          %2362 = vmatprep.subr.bf16.mxu0 0
          %2363 = vmatpush2.bf16.msra.mxu0 0
          %2364 = vmatprep.subr.bf16.mxu0 0
          %2365 = vmatpush2.bf16.msra.mxu0 0
          %2366 = vmatprep.mubr.bf16.mxu0 0
          %2367 = vmatmul.mubr.bf16.gmra.mxu0 %v2332
          %v2368 = vpop.f32.mrf.mxu0
          %v2369 = vadd.f32 %v2318, %v2368
          %v2370 = vpop.f32.mrf.mxu0
          %v2371 = vpop.f32.mrf.mxu0
          %v2372 = vpop.f32.mrf.mxu0
          %2373 = vdwg.mxu0
          %v2374 = vmax.f32 %v2369, 0.0
          %v2375 = vpack.c.bf16 %v2374, %v2374
          %v2376 = vld [vmem:[%s18] sm:$0xf]
          %v2377 = vld [vmem:[%s18 + $0x4] sm:$0xf]
          %v2378 = vld [vmem:[%s18 + $0x8] sm:$0xf]
          %v2379 = vld [vmem:[%s18 + $0xc] sm:$0xf]
          %v2380 = vld [vmem:[%s19] sm:$0x1]
          %v2385 = vunpack.c.l.b16 %v2376
          %v2386 = vunpack.c.l.b16 %v2377
          %v2387 = vunpack.c.l.b16 %v2378
          %v2388 = vunpack.c.l.b16 %v2379
          %v2389 = vpack.c.b16 %v2386, %v2385
          %v2390 = vpack.c.b16 %v2388, %v2387
          %v2394 = vsel %vm906, %v2375, 0
          %2396 = vmatprep.subr.bf16.mxu0 0
          %2397 = vmatpush1.bf16.msra.mxu0 0
          %2398 = vmatprep.subr.bf16.mxu0 0
          %2399 = vmatpush1.bf16.msra.mxu0 0
          %2400 = vmatprep.subr.bf16.mxu0 0
          %2401 = vmatpush1.bf16.msra.mxu0 0
          %2402 = vmatprep.subr.bf16.mxu0 0
          %2403 = vmatpush1.bf16.msra.mxu0 0
          %2404 = vmatprep.subr.bf16.mxu0 0
          %2405 = vmatpush1.bf16.msra.mxu0 0
          %2406 = vmatprep.subr.bf16.mxu0 0
          %2407 = vmatpush1.bf16.msra.mxu0 0
          %2408 = vmatprep.subr.bf16.mxu0 0
          %2409 = vmatpush1.bf16.msra.mxu0 %v2390
          %2410 = vmatprep.subr.bf16.mxu0 0
          %2411 = vmatpush1.bf16.msra.mxu0 %v2389
          %2412 = vmatprep.subr.bf16.mxu0 0
          %2413 = vmatpush2.bf16.msra.mxu0 0
          %2414 = vmatprep.subr.bf16.mxu0 0
          %2415 = vmatpush2.bf16.msra.mxu0 0
          %2416 = vmatprep.subr.bf16.mxu0 0
          %2417 = vmatpush2.bf16.msra.mxu0 0
          %2418 = vmatprep.subr.bf16.mxu0 0
          %2419 = vmatpush2.bf16.msra.mxu0 0
          %2420 = vmatprep.subr.bf16.mxu0 0
          %2421 = vmatpush2.bf16.msra.mxu0 0
          %2422 = vmatprep.subr.bf16.mxu0 0
          %2423 = vmatpush2.bf16.msra.mxu0 0
          %2424 = vmatprep.subr.bf16.mxu0 0
          %2425 = vmatpush2.bf16.msra.mxu0 0
          %2426 = vmatprep.subr.bf16.mxu0 0
          %2427 = vmatpush2.bf16.msra.mxu0 0
          %2428 = vmatprep.mubr.bf16.mxu0 0
          %2429 = vmatmul.mubr.bf16.gmra.mxu0 %v2394
          %v2430 = vpop.f32.mrf.mxu0
          %v2431 = vadd.f32 %v2380, %v2430
          %v2432 = vpop.f32.mrf.mxu0
          %v2433 = vpop.f32.mrf.mxu0
          %v2434 = vpop.f32.mrf.mxu0
          %2435 = vdwg.mxu0
          %v2436 = vlaneseq
          %v2437 = vshrl.u32 %v2436, 7
          %v2438 = vsub.s32 0, %v2437
          %v2439 = vrot.slane %v2431, %v2438
          %2440 = vst [vmem:[%s791] sm:$0xff] %v2439
        $region108: #{tpu_custom_call.1} parent=99 // pred_fallthru
          _
        %s2441 = sand.u32 %s544, 1
        %s2442 = scalar_lea.sflag [#allocation4], %s2441
        %s2443 = sand.u32 %s544, 1
        %s2444 = smul.addr %s2443, 8
        %s2445 = scalar_lea.vmem [#allocation3], %s2444
        // Predicated region
        $region109: #{tpu_custom_call.1} parent=99 // pred_check
          %p2446 = pneg %p554
        $region110: #{tpu_custom_call.1} parent=99 // pred_check_branch
          %2448 = sbr.rel (%p2446) target = $region112
        $region111: #{tpu_custom_call.1} parent=99 // pred_region
          %s2450 = ssub.s32 128, 128
          %2451 = vsyncadd %s2442, %s2450
          %s2452 = smul.addr %s38, 128
          %s2453 = scalar_lea.hbm %s20, %s2452
          %s2455 = sshll.u32 %s2445, 4
          %s2456 = int_to_ptr.vmem [resolvable:$true] %s2455
          %2458 = dma.vmem_to_hbm [thread:$0]  %s2456, 128, %s2453, %s2442
        $region112: #{tpu_custom_call.1} parent=99 // pred_fallthru
          _
      $region100: #{tpu_custom_call.1} parent=5 // pred_fallthru
        _
      %p2459 = scmp.le.s32.totalorder 2, %s29
      // Predicated region
      $region113: #{tpu_custom_call.1} parent=5 // pred_check
        %p2460 = pneg %p2459
      $region114: #{tpu_custom_call.1} parent=5 // pred_check_branch
        %2462 = sbr.rel (%p2460) target = $region116
      $region115: #{tpu_custom_call.1} parent=5 // pred_region
        %s2463 = ssub.s32 %s29, 2
        // Predicated region
        $region117: #{tpu_custom_call.1} parent=115 // pred_check
          %p2464 = pneg %p560
        $region118: #{tpu_custom_call.1} parent=115 // pred_check_branch
          %2466 = sbr.rel (%p2464) target = $region120
        $region119: #{tpu_custom_call.1} parent=115 // pred_region
          %s2467 = sand.u32 %s545, 1
          %s2468 = scalar_lea.sflag [#allocation4], %s2467
          %s2469 = sand.u32 %s545, 1
          %s2470 = smul.addr %s2469, 8
          %s2471 = scalar_lea.vmem [#allocation3], %s2470
          %2472 = dma.done %s2468, 128
        $region120: #{tpu_custom_call.1} parent=115 // pred_fallthru
          _
      $region116: #{tpu_custom_call.1} parent=5 // pred_fallthru
        _
    $region6: #{tpu_custom_call.1} parent=1 // loop_footer
      %s33 = sadd.s32 1, %s29
    $region7: #{tpu_custom_call.1} parent=1 // loop_footer_branch
      %28 = sbr.rel target = $region3
    $region8: #{tpu_custom_call.1} parent=1 // loop_exit
      _
    %2473 = vsyncpa [#allocation4], 1
    %s2474 = scalar_lea.sflag [#allocation4], 1
    %2475 = vsyncpa %s2474, 1

</llo_original>
